<compile_context>
chip_gen: v7x
topology: tpu7x:2x2x1
jax: 0.10.0
libtpu: 0.0.40
codegen_flags: <defaults>
</compile_context>

<pallas_src>
import functools

import jax
import jax.numpy as jnp
from jax.experimental import pallas as pl

HIDDEN_SIZE = 32          # small, consistent with the module (tied weights => embed == hidden)
NUM_LAYERS = 2
VOCAB_SIZE = 128          # multiple of 128 -> lane-dense decoder output
EMBED_SIZE = HIDDEN_SIZE  # weight tying (decoder.weight = encoder.weight) requires this
SEQ_LEN = 8
BATCH = 8

# MXU input dtype. bf16 halves weight bytes and doubles MXU throughput on
# v6e/v7x (accumulation stays f32). Use jnp.float32 for exact f32 semantics.
MATMUL_DTYPE = jnp.bfloat16


# ---------------------------------------------------------------------------
# Fused Pallas kernel: 2-layer LSTM recurrence + tied-weight decoder
# ---------------------------------------------------------------------------
def _fused_lstm_lm_kernel(*refs, seq_len, batch, hidden, num_layers):
    T, B, H, L = seq_len, batch, hidden, num_layers

    # ----- unpack refs: inputs, then outputs -----
    x_ref = refs[0]                                   # (T*B, E) embedded inputs
    layer_refs = refs[1:1 + 3 * L]                    # per layer: w_ih_t, w_hh_t, bias
    wdec_ref, bdec_ref, h0_ref, c0_ref = refs[1 + 3 * L:5 + 3 * L]
    dec_ref, hT_ref, cT_ref = refs[5 + 3 * L:8 + 3 * L]

    def mdot(a, w):
        # MXU matmul with f32 accumulation; operands cast to the weight dtype.
        return jnp.dot(a.astype(w.dtype), w, preferred_element_type=jnp.float32)

    # Lane mask selecting the "g" (cell-candidate) block of the (B, 4H) gates.
    lane = jax.lax.broadcasted_iota(jnp.int32, (B, 4 * H), 1)
    g_mask = (lane >= 2 * H) & (lane < 3 * H)

    def cell(gates, c_prev):
        # Two full-vreg EUP pushes + one VPU select instead of four (B,H) pushes.
        act = jnp.where(g_mask, jnp.tanh(gates), jax.nn.sigmoid(gates))
        i = act[:, 0:H]
        f = act[:, H:2 * H]
        g = act[:, 2 * H:3 * H]
        o = act[:, 3 * H:4 * H]
        c_new = f * c_prev + i * g
        h_new = o * jnp.tanh(c_new)
        return h_new, c_new

    # ----- layer 0: input projection hoisted out of the recurrence -----
    w_ih0 = layer_refs[0][...]
    w_hh0 = layer_refs[1][...]
    b0 = layer_refs[2][...]
    gx0 = mdot(x_ref[...], w_ih0) + b0                # (T*B, 4H), bias folded in

    h = h0_ref[0]
    c = c0_ref[0]
    cur = []
    for t in range(T):                                # fully unrolled, T static
        gates = gx0[t * B:(t + 1) * B, :] + mdot(h, w_hh0)
        h, c = cell(gates, c)
        cur.append(h)
    hT_ref[0] = h                                     # final-state write: once
    cT_ref[0] = c

    # ----- layers 1..L-1: per-step input projection (wavefronts with prev layer) -----
    for layer in range(1, L):
        w_ih = layer_refs[3 * layer][...]
        w_hh = layer_refs[3 * layer + 1][...]
        b = layer_refs[3 * layer + 2][...]
        h = h0_ref[layer]
        c = c0_ref[layer]
        nxt = []
        for t in range(T):
            gates = mdot(cur[t], w_ih) + b + mdot(h, w_hh)
            h, c = cell(gates, c)
            nxt.append(h)
        hT_ref[layer] = h
        cT_ref[layer] = c
        cur = nxt

    # ----- tied-weight decoder: lane-dense (V = 128) writes, per step -----
    wdec = wdec_ref[...]
    bdec = bdec_ref[...]
    for t in range(T):
        dec_ref[pl.ds(t * B, B), :] = mdot(cur[t], wdec) + bdec


# ---------------------------------------------------------------------------
# Wrapper around pallas_call (single invocation, everything VMEM-resident)
# ---------------------------------------------------------------------------
def fused_forward(emb2d, layer_params, wdec_t, bdec, h0_all, c0_all,
                  *, seq_len, batch):
    TB, E = emb2d.shape
    L = len(layer_params)
    H = h0_all.shape[-1]
    V = wdec_t.shape[-1]

    kernel = functools.partial(_fused_lstm_lm_kernel,
                               seq_len=seq_len, batch=batch,
                               hidden=H, num_layers=L)

    in_specs = [pl.BlockSpec((TB, E), lambda: (0, 0))]
    args = [emb2d]
    for (w_ih_t, w_hh_t, b) in layer_params:
        in_specs += [
            pl.BlockSpec(w_ih_t.shape, lambda: (0, 0)),
            pl.BlockSpec(w_hh_t.shape, lambda: (0, 0)),
            pl.BlockSpec(b.shape, lambda: (0, 0)),
        ]
        args += [w_ih_t, w_hh_t, b]
    in_specs += [
        pl.BlockSpec((H, V), lambda: (0, 0)),
        pl.BlockSpec((1, V), lambda: (0, 0)),
        pl.BlockSpec((L, batch, H), lambda: (0, 0, 0)),
        pl.BlockSpec((L, batch, H), lambda: (0, 0, 0)),
    ]
    args += [wdec_t, bdec, h0_all, c0_all]

    out_shape = (
        jax.ShapeDtypeStruct((TB, V), jnp.float32),        # decoded logits
        jax.ShapeDtypeStruct((L, batch, H), jnp.float32),  # h_T
        jax.ShapeDtypeStruct((L, batch, H), jnp.float32),  # c_T
    )
    out_specs = (
        pl.BlockSpec((TB, V), lambda: (0, 0)),
        pl.BlockSpec((L, batch, H), lambda: (0, 0, 0)),
        pl.BlockSpec((L, batch, H), lambda: (0, 0, 0)),
    )

    return pl.pallas_call(
        kernel,
        out_shape=out_shape,
        in_specs=in_specs,
        out_specs=out_specs,
    )(*args)


# ---------------------------------------------------------------------------
# Model (parameters + forward), mirroring the PyTorch LSTMModel
# ---------------------------------------------------------------------------
class LSTMModelPallas:
    def __init__(self, vocab_size, embed_size, hidden_size, num_layers, dropout, key):
        assert embed_size == hidden_size, "weight tying requires embed_size == hidden_size"
        self.vocab_size = vocab_size
        self.embed_size = embed_size
        self.hidden_size = hidden_size
        self.num_layers = num_layers
        # TODO(synk): stochastic dropout not implemented; treated as eval-mode identity.
        self.dropout = dropout

        initrange = 0.1
        k_emb, key = jax.random.split(key)
        # encoder.weight ~ U(-0.1, 0.1); decoder.weight is tied to it.
        self.encoder_weight = jax.random.uniform(
            k_emb, (vocab_size, embed_size), jnp.float32, -initrange, initrange)
        # Tied decoder weight, pre-transposed ONCE to (H, V) for x @ W layout.
        self.decoder_weight_t = self.encoder_weight.T.astype(MATMUL_DTYPE)
        self.decoder_bias = jnp.zeros((1, vocab_size), jnp.float32)

        # LSTM params, PyTorch default init U(-1/sqrt(H), 1/sqrt(H)).
        # Stored pre-transposed ((in,4H)/(H,4H)) with the two biases pre-added.
        stdv = 1.0 / float(hidden_size) ** 0.5
        self.lstm_params = []
        for layer in range(num_layers):
            in_size = embed_size if layer == 0 else hidden_size
            key, k1, k2, k3, k4 = jax.random.split(key, 5)
            w_ih = jax.random.uniform(k1, (4 * hidden_size, in_size), jnp.float32, -stdv, stdv)
            w_hh = jax.random.uniform(k2, (4 * hidden_size, hidden_size), jnp.float32, -stdv, stdv)
            b_ih = jax.random.uniform(k3, (4 * hidden_size,), jnp.float32, -stdv, stdv)
            b_hh = jax.random.uniform(k4, (4 * hidden_size,), jnp.float32, -stdv, stdv)
            self.lstm_params.append((
                w_ih.T.astype(MATMUL_DTYPE),                    # (in, 4H)
                w_hh.T.astype(MATMUL_DTYPE),                    # (H, 4H)
                (b_ih + b_hh).reshape(1, 4 * hidden_size),      # (1, 4H), f32
            ))

    def init_hidden(self, batch_size):
        z = jnp.zeros((self.num_layers, batch_size, self.hidden_size), jnp.float32)
        return (z, z)

    def __call__(self, tokens, hidden):
        """tokens: (T, B) int32; hidden: tuple of (num_layers, B, H)."""
        h0_all, c0_all = hidden
        T, B = tokens.shape
        # Embedding lookup (glue; gather handled by XLA). dropout = identity (eval).
        emb = jnp.take(self.encoder_weight, tokens, axis=0)      # (T, B, E)
        emb2d = emb.reshape(T * B, self.embed_size)              # lane-friendly 2D view

        decoded, h_n, c_n = fused_forward(
            emb2d, self.lstm_params, self.decoder_weight_t, self.decoder_bias,
            h0_all, c0_all, seq_len=T, batch=B)
        return decoded, (h_n, c_n)


# ---------------------------------------------------------------------------
# Main
# ---------------------------------------------------------------------------
if __name__ == "__main__":
    key = jax.random.PRNGKey(0)
    k_model, k_tokens = jax.random.split(key)

    model = LSTMModelPallas(VOCAB_SIZE, EMBED_SIZE, HIDDEN_SIZE,
                            NUM_LAYERS, dropout=0.0, key=k_model)

    tokens = jax.random.randint(k_tokens, (SEQ_LEN, BATCH), 0, VOCAB_SIZE, dtype=jnp.int32)
    hidden = model.init_hidden(BATCH)

    decoded, (h_n, c_n) = model(tokens, hidden)
    decoded = jax.block_until_ready(decoded)
    h_n = jax.block_until_ready(h_n)
    c_n = jax.block_until_ready(c_n)

    assert decoded.shape == (SEQ_LEN * BATCH, VOCAB_SIZE)
    assert h_n.shape == (NUM_LAYERS, BATCH, HIDDEN_SIZE)
    assert c_n.shape == (NUM_LAYERS, BATCH, HIDDEN_SIZE)
    assert bool(jnp.all(jnp.isfinite(decoded)))

    print("KERNEL_OK")
</pallas_src>

<mosaic_0001>
module attributes {stable_mosaic.version = 11 : i64} {
  func.func @_fused_lstm_lm_kernel(%arg0: memref<64x32xf32, #tpu.memory_space<vmem>>, %arg1: memref<32x128xbf16, #tpu.memory_space<vmem>>, %arg2: memref<32x128xbf16, #tpu.memory_space<vmem>>, %arg3: memref<1x128xf32, #tpu.memory_space<vmem>>, %arg4: memref<32x128xbf16, #tpu.memory_space<vmem>>, %arg5: memref<32x128xbf16, #tpu.memory_space<vmem>>, %arg6: memref<1x128xf32, #tpu.memory_space<vmem>>, %arg7: memref<32x128xbf16, #tpu.memory_space<vmem>>, %arg8: memref<1x128xf32, #tpu.memory_space<vmem>>, %arg9: memref<2x8x32xf32, #tpu.memory_space<vmem>>, %arg10: memref<2x8x32xf32, #tpu.memory_space<vmem>>, %arg11: memref<64x128xf32, #tpu.memory_space<vmem>>, %arg12: memref<2x8x32xf32, #tpu.memory_space<vmem>>, %arg13: memref<2x8x32xf32, #tpu.memory_space<vmem>>) attributes {dimension_semantics = [], scalar_prefetch = 0 : i64, scratch_operands = 0 : i64, tpu.core_type = #tpu.core_type<tc>} {
    %0 = tpu.iota {dimensions = array<i32: 1>} : vector<8x128xi32>
    %c64_i32 = arith.constant 64 : i32
    %1 = vector.broadcast %c64_i32 : i32 to vector<8x128xi32>
    %2 = arith.cmpi sge, %0, %1 : vector<8x128xi32>
    %c96_i32 = arith.constant 96 : i32
    %3 = vector.broadcast %c96_i32 : i32 to vector<8x128xi32>
    %4 = arith.cmpi slt, %0, %3 : vector<8x128xi32>
    %5 = arith.andi %2, %4 : vector<8x128xi1>
    %c0 = arith.constant 0 : index
    %c0_0 = arith.constant 0 : index
    %6 = vector.load %arg1[%c0, %c0_0] : memref<32x128xbf16, #tpu.memory_space<vmem>>, vector<32x128xbf16>
    %c0_1 = arith.constant 0 : index
    %c0_2 = arith.constant 0 : index
    %7 = vector.load %arg2[%c0_1, %c0_2] : memref<32x128xbf16, #tpu.memory_space<vmem>>, vector<32x128xbf16>
    %c0_3 = arith.constant 0 : index
    %c0_4 = arith.constant 0 : index
    %8 = vector.load %arg3[%c0_3, %c0_4] : memref<1x128xf32, #tpu.memory_space<vmem>>, vector<1x128xf32>
    %c0_5 = arith.constant 0 : index
    %c0_6 = arith.constant 0 : index
    %9 = vector.load %arg0[%c0_5, %c0_6] : memref<64x32xf32, #tpu.memory_space<vmem>>, vector<64x32xf32>
    %10 = arith.truncf %9 : vector<64x32xf32> to vector<64x32xbf16>
    %cst = arith.constant dense<0.000000e+00> : vector<64x128xf32>
    %11 = tpu.matmul %10, %6, %cst {dimension_numbers = #tpu.dot_dimension_numbers<[1], [0], [0], [1], [0, 0, 1, 1], [], []>} : vector<64x32xbf16>, vector<32x128xbf16>, vector<64x128xf32> -> vector<64x128xf32>
    %12 = vector.broadcast %8 : vector<1x128xf32> to vector<64x128xf32>
    %13 = arith.addf %11, %12 : vector<64x128xf32>
    %c0_7 = arith.constant 0 : index
    %c0_8 = arith.constant 0 : index
    %c0_9 = arith.constant 0 : index
    %14 = vector.load %arg9[%c0_7, %c0_8, %c0_9] : memref<2x8x32xf32, #tpu.memory_space<vmem>>, vector<1x8x32xf32>
    %15 = vector.shape_cast %14 : vector<1x8x32xf32> to vector<8x32xf32>
    %c0_10 = arith.constant 0 : index
    %c0_11 = arith.constant 0 : index
    %c0_12 = arith.constant 0 : index
    %16 = vector.load %arg10[%c0_10, %c0_11, %c0_12] : memref<2x8x32xf32, #tpu.memory_space<vmem>>, vector<1x8x32xf32>
    %17 = vector.shape_cast %16 : vector<1x8x32xf32> to vector<8x32xf32>
    %18 = vector.extract_strided_slice %13 {offsets = [0, 0], sizes = [8, 128], strides = [1, 1]} : vector<64x128xf32> to vector<8x128xf32>
    %19 = arith.truncf %15 : vector<8x32xf32> to vector<8x32xbf16>
    %cst_13 = arith.constant dense<0.000000e+00> : vector<8x128xf32>
    %20 = tpu.matmul %19, %7, %cst_13 {dimension_numbers = #tpu.dot_dimension_numbers<[1], [0], [0], [1], [0, 0, 1, 1], [], []>} : vector<8x32xbf16>, vector<32x128xbf16>, vector<8x128xf32> -> vector<8x128xf32>
    %21 = arith.addf %18, %20 : vector<8x128xf32>
    %22 = math.tanh %21 : vector<8x128xf32>
    %23 = arith.negf %21 : vector<8x128xf32>
    %24 = math.exp %23 : vector<8x128xf32>
    %cst_14 = arith.constant 1.000000e+00 : f32
    %25 = vector.broadcast %cst_14 : f32 to vector<8x128xf32>
    %26 = arith.addf %25, %24 : vector<8x128xf32>
    %27 = arith.divf %25, %26 : vector<8x128xf32>
    %28 = arith.select %5, %22, %27 : vector<8x128xi1>, vector<8x128xf32>
    %29 = vector.extract_strided_slice %28 {offsets = [0, 0], sizes = [8, 32], strides = [1, 1]} : vector<8x128xf32> to vector<8x32xf32>
    %30 = vector.extract_strided_slice %28 {offsets = [0, 32], sizes = [8, 32], strides = [1, 1]} : vector<8x128xf32> to vector<8x32xf32>
    %31 = vector.extract_strided_slice %28 {offsets = [0, 64], sizes = [8, 32], strides = [1, 1]} : vector<8x128xf32> to vector<8x32xf32>
    %32 = vector.extract_strided_slice %28 {offsets = [0, 96], sizes = [8, 32], strides = [1, 1]} : vector<8x128xf32> to vector<8x32xf32>
    %33 = arith.mulf %30, %17 : vector<8x32xf32>
    %34 = arith.mulf %29, %31 : vector<8x32xf32>
    %35 = arith.addf %33, %34 : vector<8x32xf32>
    %36 = math.tanh %35 : vector<8x32xf32>
    %37 = arith.mulf %32, %36 : vector<8x32xf32>
    %38 = vector.extract_strided_slice %13 {offsets = [8, 0], sizes = [8, 128], strides = [1, 1]} : vector<64x128xf32> to vector<8x128xf32>
    %39 = arith.truncf %37 : vector<8x32xf32> to vector<8x32xbf16>
    %cst_15 = arith.constant dense<0.000000e+00> : vector<8x128xf32>
    %40 = tpu.matmul %39, %7, %cst_15 {dimension_numbers = #tpu.dot_dimension_numbers<[1], [0], [0], [1], [0, 0, 1, 1], [], []>} : vector<8x32xbf16>, vector<32x128xbf16>, vector<8x128xf32> -> vector<8x128xf32>
    %41 = arith.addf %38, %40 : vector<8x128xf32>
    %42 = math.tanh %41 : vector<8x128xf32>
    %43 = arith.negf %41 : vector<8x128xf32>
    %44 = math.exp %43 : vector<8x128xf32>
    %cst_16 = arith.constant 1.000000e+00 : f32
    %45 = vector.broadcast %cst_16 : f32 to vector<8x128xf32>
    %46 = arith.addf %45, %44 : vector<8x128xf32>
    %47 = arith.divf %45, %46 : vector<8x128xf32>
    %48 = arith.select %5, %42, %47 : vector<8x128xi1>, vector<8x128xf32>
    %49 = vector.extract_strided_slice %48 {offsets = [0, 0], sizes = [8, 32], strides = [1, 1]} : vector<8x128xf32> to vector<8x32xf32>
    %50 = vector.extract_strided_slice %48 {offsets = [0, 32], sizes = [8, 32], strides = [1, 1]} : vector<8x128xf32> to vector<8x32xf32>
    %51 = vector.extract_strided_slice %48 {offsets = [0, 64], sizes = [8, 32], strides = [1, 1]} : vector<8x128xf32> to vector<8x32xf32>
    %52 = vector.extract_strided_slice %48 {offsets = [0, 96], sizes = [8, 32], strides = [1, 1]} : vector<8x128xf32> to vector<8x32xf32>
    %53 = arith.mulf %50, %35 : vector<8x32xf32>
    %54 = arith.mulf %49, %51 : vector<8x32xf32>
    %55 = arith.addf %53, %54 : vector<8x32xf32>
    %56 = math.tanh %55 : vector<8x32xf32>
    %57 = arith.mulf %52, %56 : vector<8x32xf32>
    %58 = vector.extract_strided_slice %13 {offsets = [16, 0], sizes = [8, 128], strides = [1, 1]} : vector<64x128xf32> to vector<8x128xf32>
    %59 = arith.truncf %57 : vector<8x32xf32> to vector<8x32xbf16>
    %cst_17 = arith.constant dense<0.000000e+00> : vector<8x128xf32>
    %60 = tpu.matmul %59, %7, %cst_17 {dimension_numbers = #tpu.dot_dimension_numbers<[1], [0], [0], [1], [0, 0, 1, 1], [], []>} : vector<8x32xbf16>, vector<32x128xbf16>, vector<8x128xf32> -> vector<8x128xf32>
    %61 = arith.addf %58, %60 : vector<8x128xf32>
    %62 = math.tanh %61 : vector<8x128xf32>
    %63 = arith.negf %61 : vector<8x128xf32>
    %64 = math.exp %63 : vector<8x128xf32>
    %cst_18 = arith.constant 1.000000e+00 : f32
    %65 = vector.broadcast %cst_18 : f32 to vector<8x128xf32>
    %66 = arith.addf %65, %64 : vector<8x128xf32>
    %67 = arith.divf %65, %66 : vector<8x128xf32>
    %68 = arith.select %5, %62, %67 : vector<8x128xi1>, vector<8x128xf32>
    %69 = vector.extract_strided_slice %68 {offsets = [0, 0], sizes = [8, 32], strides = [1, 1]} : vector<8x128xf32> to vector<8x32xf32>
    %70 = vector.extract_strided_slice %68 {offsets = [0, 32], sizes = [8, 32], strides = [1, 1]} : vector<8x128xf32> to vector<8x32xf32>
    %71 = vector.extract_strided_slice %68 {offsets = [0, 64], sizes = [8, 32], strides = [1, 1]} : vector<8x128xf32> to vector<8x32xf32>
    %72 = vector.extract_strided_slice %68 {offsets = [0, 96], sizes = [8, 32], strides = [1, 1]} : vector<8x128xf32> to vector<8x32xf32>
    %73 = arith.mulf %70, %55 : vector<8x32xf32>
    %74 = arith.mulf %69, %71 : vector<8x32xf32>
    %75 = arith.addf %73, %74 : vector<8x32xf32>
    %76 = math.tanh %75 : vector<8x32xf32>
    %77 = arith.mulf %72, %76 : vector<8x32xf32>
    %78 = vector.extract_strided_slice %13 {offsets = [24, 0], sizes = [8, 128], strides = [1, 1]} : vector<64x128xf32> to vector<8x128xf32>
    %79 = arith.truncf %77 : vector<8x32xf32> to vector<8x32xbf16>
    %cst_19 = arith.constant dense<0.000000e+00> : vector<8x128xf32>
    %80 = tpu.matmul %79, %7, %cst_19 {dimension_numbers = #tpu.dot_dimension_numbers<[1], [0], [0], [1], [0, 0, 1, 1], [], []>} : vector<8x32xbf16>, vector<32x128xbf16>, vector<8x128xf32> -> vector<8x128xf32>
    %81 = arith.addf %78, %80 : vector<8x128xf32>
    %82 = math.tanh %81 : vector<8x128xf32>
    %83 = arith.negf %81 : vector<8x128xf32>
    %84 = math.exp %83 : vector<8x128xf32>
    %cst_20 = arith.constant 1.000000e+00 : f32
    %85 = vector.broadcast %cst_20 : f32 to vector<8x128xf32>
    %86 = arith.addf %85, %84 : vector<8x128xf32>
    %87 = arith.divf %85, %86 : vector<8x128xf32>
    %88 = arith.select %5, %82, %87 : vector<8x128xi1>, vector<8x128xf32>
    %89 = vector.extract_strided_slice %88 {offsets = [0, 0], sizes = [8, 32], strides = [1, 1]} : vector<8x128xf32> to vector<8x32xf32>
    %90 = vector.extract_strided_slice %88 {offsets = [0, 32], sizes = [8, 32], strides = [1, 1]} : vector<8x128xf32> to vector<8x32xf32>
    %91 = vector.extract_strided_slice %88 {offsets = [0, 64], sizes = [8, 32], strides = [1, 1]} : vector<8x128xf32> to vector<8x32xf32>
    %92 = vector.extract_strided_slice %88 {offsets = [0, 96], sizes = [8, 32], strides = [1, 1]} : vector<8x128xf32> to vector<8x32xf32>
    %93 = arith.mulf %90, %75 : vector<8x32xf32>
    %94 = arith.mulf %89, %91 : vector<8x32xf32>
    %95 = arith.addf %93, %94 : vector<8x32xf32>
    %96 = math.tanh %95 : vector<8x32xf32>
    %97 = arith.mulf %92, %96 : vector<8x32xf32>
    %98 = vector.extract_strided_slice %13 {offsets = [32, 0], sizes = [8, 128], strides = [1, 1]} : vector<64x128xf32> to vector<8x128xf32>
    %99 = arith.truncf %97 : vector<8x32xf32> to vector<8x32xbf16>
    %cst_21 = arith.constant dense<0.000000e+00> : vector<8x128xf32>
    %100 = tpu.matmul %99, %7, %cst_21 {dimension_numbers = #tpu.dot_dimension_numbers<[1], [0], [0], [1], [0, 0, 1, 1], [], []>} : vector<8x32xbf16>, vector<32x128xbf16>, vector<8x128xf32> -> vector<8x128xf32>
    %101 = arith.addf %98, %100 : vector<8x128xf32>
    %102 = math.tanh %101 : vector<8x128xf32>
    %103 = arith.negf %101 : vector<8x128xf32>
    %104 = math.exp %103 : vector<8x128xf32>
    %cst_22 = arith.constant 1.000000e+00 : f32
    %105 = vector.broadcast %cst_22 : f32 to vector<8x128xf32>
    %106 = arith.addf %105, %104 : vector<8x128xf32>
    %107 = arith.divf %105, %106 : vector<8x128xf32>
    %108 = arith.select %5, %102, %107 : vector<8x128xi1>, vector<8x128xf32>
    %109 = vector.extract_strided_slice %108 {offsets = [0, 0], sizes = [8, 32], strides = [1, 1]} : vector<8x128xf32> to vector<8x32xf32>
    %110 = vector.extract_strided_slice %108 {offsets = [0, 32], sizes = [8, 32], strides = [1, 1]} : vector<8x128xf32> to vector<8x32xf32>
    %111 = vector.extract_strided_slice %108 {offsets = [0, 64], sizes = [8, 32], strides = [1, 1]} : vector<8x128xf32> to vector<8x32xf32>
    %112 = vector.extract_strided_slice %108 {offsets = [0, 96], sizes = [8, 32], strides = [1, 1]} : vector<8x128xf32> to vector<8x32xf32>
    %113 = arith.mulf %110, %95 : vector<8x32xf32>
    %114 = arith.mulf %109, %111 : vector<8x32xf32>
    %115 = arith.addf %113, %114 : vector<8x32xf32>
    %116 = math.tanh %115 : vector<8x32xf32>
    %117 = arith.mulf %112, %116 : vector<8x32xf32>
    %118 = vector.extract_strided_slice %13 {offsets = [40, 0], sizes = [8, 128], strides = [1, 1]} : vector<64x128xf32> to vector<8x128xf32>
    %119 = arith.truncf %117 : vector<8x32xf32> to vector<8x32xbf16>
    %cst_23 = arith.constant dense<0.000000e+00> : vector<8x128xf32>
    %120 = tpu.matmul %119, %7, %cst_23 {dimension_numbers = #tpu.dot_dimension_numbers<[1], [0], [0], [1], [0, 0, 1, 1], [], []>} : vector<8x32xbf16>, vector<32x128xbf16>, vector<8x128xf32> -> vector<8x128xf32>
    %121 = arith.addf %118, %120 : vector<8x128xf32>
    %122 = math.tanh %121 : vector<8x128xf32>
    %123 = arith.negf %121 : vector<8x128xf32>
    %124 = math.exp %123 : vector<8x128xf32>
    %cst_24 = arith.constant 1.000000e+00 : f32
    %125 = vector.broadcast %cst_24 : f32 to vector<8x128xf32>
    %126 = arith.addf %125, %124 : vector<8x128xf32>
    %127 = arith.divf %125, %126 : vector<8x128xf32>
    %128 = arith.select %5, %122, %127 : vector<8x128xi1>, vector<8x128xf32>
    %129 = vector.extract_strided_slice %128 {offsets = [0, 0], sizes = [8, 32], strides = [1, 1]} : vector<8x128xf32> to vector<8x32xf32>
    %130 = vector.extract_strided_slice %128 {offsets = [0, 32], sizes = [8, 32], strides = [1, 1]} : vector<8x128xf32> to vector<8x32xf32>
    %131 = vector.extract_strided_slice %128 {offsets = [0, 64], sizes = [8, 32], strides = [1, 1]} : vector<8x128xf32> to vector<8x32xf32>
    %132 = vector.extract_strided_slice %128 {offsets = [0, 96], sizes = [8, 32], strides = [1, 1]} : vector<8x128xf32> to vector<8x32xf32>
    %133 = arith.mulf %130, %115 : vector<8x32xf32>
    %134 = arith.mulf %129, %131 : vector<8x32xf32>
    %135 = arith.addf %133, %134 : vector<8x32xf32>
    %136 = math.tanh %135 : vector<8x32xf32>
    %137 = arith.mulf %132, %136 : vector<8x32xf32>
    %138 = vector.extract_strided_slice %13 {offsets = [48, 0], sizes = [8, 128], strides = [1, 1]} : vector<64x128xf32> to vector<8x128xf32>
    %139 = arith.truncf %137 : vector<8x32xf32> to vector<8x32xbf16>
    %cst_25 = arith.constant dense<0.000000e+00> : vector<8x128xf32>
    %140 = tpu.matmul %139, %7, %cst_25 {dimension_numbers = #tpu.dot_dimension_numbers<[1], [0], [0], [1], [0, 0, 1, 1], [], []>} : vector<8x32xbf16>, vector<32x128xbf16>, vector<8x128xf32> -> vector<8x128xf32>
    %141 = arith.addf %138, %140 : vector<8x128xf32>
    %142 = math.tanh %141 : vector<8x128xf32>
    %143 = arith.negf %141 : vector<8x128xf32>
    %144 = math.exp %143 : vector<8x128xf32>
    %cst_26 = arith.constant 1.000000e+00 : f32
    %145 = vector.broadcast %cst_26 : f32 to vector<8x128xf32>
    %146 = arith.addf %145, %144 : vector<8x128xf32>
    %147 = arith.divf %145, %146 : vector<8x128xf32>
    %148 = arith.select %5, %142, %147 : vector<8x128xi1>, vector<8x128xf32>
    %149 = vector.extract_strided_slice %148 {offsets = [0, 0], sizes = [8, 32], strides = [1, 1]} : vector<8x128xf32> to vector<8x32xf32>
    %150 = vector.extract_strided_slice %148 {offsets = [0, 32], sizes = [8, 32], strides = [1, 1]} : vector<8x128xf32> to vector<8x32xf32>
    %151 = vector.extract_strided_slice %148 {offsets = [0, 64], sizes = [8, 32], strides = [1, 1]} : vector<8x128xf32> to vector<8x32xf32>
    %152 = vector.extract_strided_slice %148 {offsets = [0, 96], sizes = [8, 32], strides = [1, 1]} : vector<8x128xf32> to vector<8x32xf32>
    %153 = arith.mulf %150, %135 : vector<8x32xf32>
    %154 = arith.mulf %149, %151 : vector<8x32xf32>
    %155 = arith.addf %153, %154 : vector<8x32xf32>
    %156 = math.tanh %155 : vector<8x32xf32>
    %157 = arith.mulf %152, %156 : vector<8x32xf32>
    %158 = vector.extract_strided_slice %13 {offsets = [56, 0], sizes = [8, 128], strides = [1, 1]} : vector<64x128xf32> to vector<8x128xf32>
    %159 = arith.truncf %157 : vector<8x32xf32> to vector<8x32xbf16>
    %cst_27 = arith.constant dense<0.000000e+00> : vector<8x128xf32>
    %160 = tpu.matmul %159, %7, %cst_27 {dimension_numbers = #tpu.dot_dimension_numbers<[1], [0], [0], [1], [0, 0, 1, 1], [], []>} : vector<8x32xbf16>, vector<32x128xbf16>, vector<8x128xf32> -> vector<8x128xf32>
    %161 = arith.addf %158, %160 : vector<8x128xf32>
    %162 = math.tanh %161 : vector<8x128xf32>
    %163 = arith.negf %161 : vector<8x128xf32>
    %164 = math.exp %163 : vector<8x128xf32>
    %cst_28 = arith.constant 1.000000e+00 : f32
    %165 = vector.broadcast %cst_28 : f32 to vector<8x128xf32>
    %166 = arith.addf %165, %164 : vector<8x128xf32>
    %167 = arith.divf %165, %166 : vector<8x128xf32>
    %168 = arith.select %5, %162, %167 : vector<8x128xi1>, vector<8x128xf32>
    %169 = vector.extract_strided_slice %168 {offsets = [0, 0], sizes = [8, 32], strides = [1, 1]} : vector<8x128xf32> to vector<8x32xf32>
    %170 = vector.extract_strided_slice %168 {offsets = [0, 32], sizes = [8, 32], strides = [1, 1]} : vector<8x128xf32> to vector<8x32xf32>
    %171 = vector.extract_strided_slice %168 {offsets = [0, 64], sizes = [8, 32], strides = [1, 1]} : vector<8x128xf32> to vector<8x32xf32>
    %172 = vector.extract_strided_slice %168 {offsets = [0, 96], sizes = [8, 32], strides = [1, 1]} : vector<8x128xf32> to vector<8x32xf32>
    %173 = arith.mulf %170, %155 : vector<8x32xf32>
    %174 = arith.mulf %169, %171 : vector<8x32xf32>
    %175 = arith.addf %173, %174 : vector<8x32xf32>
    %176 = math.tanh %175 : vector<8x32xf32>
    %177 = arith.mulf %172, %176 : vector<8x32xf32>
    %c0_29 = arith.constant 0 : index
    %c0_30 = arith.constant 0 : index
    %c0_31 = arith.constant 0 : index
    %178 = vector.load %arg12[%c0_29, %c0_30, %c0_31] : memref<2x8x32xf32, #tpu.memory_space<vmem>>, vector<1x8x32xf32>
    %179 = vector.shape_cast %178 : vector<1x8x32xf32> to vector<8x32xf32>
    %180 = vector.shape_cast %177 : vector<8x32xf32> to vector<1x8x32xf32>
    tpu.vector_store %arg12[%c0_29, %c0_30, %c0_31], %180 {strides = array<i32>} : memref<2x8x32xf32, #tpu.memory_space<vmem>>, vector<1x8x32xf32>,
    %c0_32 = arith.constant 0 : index
    %c0_33 = arith.constant 0 : index
    %c0_34 = arith.constant 0 : index
    %181 = vector.load %arg13[%c0_32, %c0_33, %c0_34] : memref<2x8x32xf32, #tpu.memory_space<vmem>>, vector<1x8x32xf32>
    %182 = vector.shape_cast %181 : vector<1x8x32xf32> to vector<8x32xf32>
    %183 = vector.shape_cast %175 : vector<8x32xf32> to vector<1x8x32xf32>
    tpu.vector_store %arg13[%c0_32, %c0_33, %c0_34], %183 {strides = array<i32>} : memref<2x8x32xf32, #tpu.memory_space<vmem>>, vector<1x8x32xf32>,
    %c0_35 = arith.constant 0 : index
    %c0_36 = arith.constant 0 : index
    %184 = vector.load %arg4[%c0_35, %c0_36] : memref<32x128xbf16, #tpu.memory_space<vmem>>, vector<32x128xbf16>
    %c0_37 = arith.constant 0 : index
    %c0_38 = arith.constant 0 : index
    %185 = vector.load %arg5[%c0_37, %c0_38] : memref<32x128xbf16, #tpu.memory_space<vmem>>, vector<32x128xbf16>
    %c0_39 = arith.constant 0 : index
    %c0_40 = arith.constant 0 : index
    %186 = vector.load %arg6[%c0_39, %c0_40] : memref<1x128xf32, #tpu.memory_space<vmem>>, vector<1x128xf32>
    %c1 = arith.constant 1 : index
    %c0_41 = arith.constant 0 : index
    %c0_42 = arith.constant 0 : index
    %187 = vector.load %arg9[%c1, %c0_41, %c0_42] : memref<2x8x32xf32, #tpu.memory_space<vmem>>, vector<1x8x32xf32>
    %188 = vector.shape_cast %187 : vector<1x8x32xf32> to vector<8x32xf32>
    %c1_43 = arith.constant 1 : index
    %c0_44 = arith.constant 0 : index
    %c0_45 = arith.constant 0 : index
    %189 = vector.load %arg10[%c1_43, %c0_44, %c0_45] : memref<2x8x32xf32, #tpu.memory_space<vmem>>, vector<1x8x32xf32>
    %190 = vector.shape_cast %189 : vector<1x8x32xf32> to vector<8x32xf32>
    %191 = arith.truncf %37 : vector<8x32xf32> to vector<8x32xbf16>
    %cst_46 = arith.constant dense<0.000000e+00> : vector<8x128xf32>
    %192 = tpu.matmul %191, %184, %cst_46 {dimension_numbers = #tpu.dot_dimension_numbers<[1], [0], [0], [1], [0, 0, 1, 1], [], []>} : vector<8x32xbf16>, vector<32x128xbf16>, vector<8x128xf32> -> vector<8x128xf32>
    %193 = vector.broadcast %186 : vector<1x128xf32> to vector<8x128xf32>
    %194 = arith.addf %192, %193 : vector<8x128xf32>
    %195 = arith.truncf %188 : vector<8x32xf32> to vector<8x32xbf16>
    %cst_47 = arith.constant dense<0.000000e+00> : vector<8x128xf32>
    %196 = tpu.matmul %195, %185, %cst_47 {dimension_numbers = #tpu.dot_dimension_numbers<[1], [0], [0], [1], [0, 0, 1, 1], [], []>} : vector<8x32xbf16>, vector<32x128xbf16>, vector<8x128xf32> -> vector<8x128xf32>
    %197 = arith.addf %194, %196 : vector<8x128xf32>
    %198 = math.tanh %197 : vector<8x128xf32>
    %199 = arith.negf %197 : vector<8x128xf32>
    %200 = math.exp %199 : vector<8x128xf32>
    %cst_48 = arith.constant 1.000000e+00 : f32
    %201 = vector.broadcast %cst_48 : f32 to vector<8x128xf32>
    %202 = arith.addf %201, %200 : vector<8x128xf32>
    %203 = arith.divf %201, %202 : vector<8x128xf32>
    %204 = arith.select %5, %198, %203 : vector<8x128xi1>, vector<8x128xf32>
    %205 = vector.extract_strided_slice %204 {offsets = [0, 0], sizes = [8, 32], strides = [1, 1]} : vector<8x128xf32> to vector<8x32xf32>
    %206 = vector.extract_strided_slice %204 {offsets = [0, 32], sizes = [8, 32], strides = [1, 1]} : vector<8x128xf32> to vector<8x32xf32>
    %207 = vector.extract_strided_slice %204 {offsets = [0, 64], sizes = [8, 32], strides = [1, 1]} : vector<8x128xf32> to vector<8x32xf32>
    %208 = vector.extract_strided_slice %204 {offsets = [0, 96], sizes = [8, 32], strides = [1, 1]} : vector<8x128xf32> to vector<8x32xf32>
    %209 = arith.mulf %206, %190 : vector<8x32xf32>
    %210 = arith.mulf %205, %207 : vector<8x32xf32>
    %211 = arith.addf %209, %210 : vector<8x32xf32>
    %212 = math.tanh %211 : vector<8x32xf32>
    %213 = arith.mulf %208, %212 : vector<8x32xf32>
    %214 = arith.truncf %57 : vector<8x32xf32> to vector<8x32xbf16>
    %cst_49 = arith.constant dense<0.000000e+00> : vector<8x128xf32>
    %215 = tpu.matmul %214, %184, %cst_49 {dimension_numbers = #tpu.dot_dimension_numbers<[1], [0], [0], [1], [0, 0, 1, 1], [], []>} : vector<8x32xbf16>, vector<32x128xbf16>, vector<8x128xf32> -> vector<8x128xf32>
    %216 = vector.broadcast %186 : vector<1x128xf32> to vector<8x128xf32>
    %217 = arith.addf %215, %216 : vector<8x128xf32>
    %218 = arith.truncf %213 : vector<8x32xf32> to vector<8x32xbf16>
    %cst_50 = arith.constant dense<0.000000e+00> : vector<8x128xf32>
    %219 = tpu.matmul %218, %185, %cst_50 {dimension_numbers = #tpu.dot_dimension_numbers<[1], [0], [0], [1], [0, 0, 1, 1], [], []>} : vector<8x32xbf16>, vector<32x128xbf16>, vector<8x128xf32> -> vector<8x128xf32>
    %220 = arith.addf %217, %219 : vector<8x128xf32>
    %221 = math.tanh %220 : vector<8x128xf32>
    %222 = arith.negf %220 : vector<8x128xf32>
    %223 = math.exp %222 : vector<8x128xf32>
    %cst_51 = arith.constant 1.000000e+00 : f32
    %224 = vector.broadcast %cst_51 : f32 to vector<8x128xf32>
    %225 = arith.addf %224, %223 : vector<8x128xf32>
    %226 = arith.divf %224, %225 : vector<8x128xf32>
    %227 = arith.select %5, %221, %226 : vector<8x128xi1>, vector<8x128xf32>
    %228 = vector.extract_strided_slice %227 {offsets = [0, 0], sizes = [8, 32], strides = [1, 1]} : vector<8x128xf32> to vector<8x32xf32>
    %229 = vector.extract_strided_slice %227 {offsets = [0, 32], sizes = [8, 32], strides = [1, 1]} : vector<8x128xf32> to vector<8x32xf32>
    %230 = vector.extract_strided_slice %227 {offsets = [0, 64], sizes = [8, 32], strides = [1, 1]} : vector<8x128xf32> to vector<8x32xf32>
    %231 = vector.extract_strided_slice %227 {offsets = [0, 96], sizes = [8, 32], strides = [1, 1]} : vector<8x128xf32> to vector<8x32xf32>
    %232 = arith.mulf %229, %211 : vector<8x32xf32>
    %233 = arith.mulf %228, %230 : vector<8x32xf32>
    %234 = arith.addf %232, %233 : vector<8x32xf32>
    %235 = math.tanh %234 : vector<8x32xf32>
    %236 = arith.mulf %231, %235 : vector<8x32xf32>
    %237 = arith.truncf %77 : vector<8x32xf32> to vector<8x32xbf16>
    %cst_52 = arith.constant dense<0.000000e+00> : vector<8x128xf32>
    %238 = tpu.matmul %237, %184, %cst_52 {dimension_numbers = #tpu.dot_dimension_numbers<[1], [0], [0], [1], [0, 0, 1, 1], [], []>} : vector<8x32xbf16>, vector<32x128xbf16>, vector<8x128xf32> -> vector<8x128xf32>
    %239 = vector.broadcast %186 : vector<1x128xf32> to vector<8x128xf32>
    %240 = arith.addf %238, %239 : vector<8x128xf32>
    %241 = arith.truncf %236 : vector<8x32xf32> to vector<8x32xbf16>
    %cst_53 = arith.constant dense<0.000000e+00> : vector<8x128xf32>
    %242 = tpu.matmul %241, %185, %cst_53 {dimension_numbers = #tpu.dot_dimension_numbers<[1], [0], [0], [1], [0, 0, 1, 1], [], []>} : vector<8x32xbf16>, vector<32x128xbf16>, vector<8x128xf32> -> vector<8x128xf32>
    %243 = arith.addf %240, %242 : vector<8x128xf32>
    %244 = math.tanh %243 : vector<8x128xf32>
    %245 = arith.negf %243 : vector<8x128xf32>
    %246 = math.exp %245 : vector<8x128xf32>
    %cst_54 = arith.constant 1.000000e+00 : f32
    %247 = vector.broadcast %cst_54 : f32 to vector<8x128xf32>
    %248 = arith.addf %247, %246 : vector<8x128xf32>
    %249 = arith.divf %247, %248 : vector<8x128xf32>
    %250 = arith.select %5, %244, %249 : vector<8x128xi1>, vector<8x128xf32>
    %251 = vector.extract_strided_slice %250 {offsets = [0, 0], sizes = [8, 32], strides = [1, 1]} : vector<8x128xf32> to vector<8x32xf32>
    %252 = vector.extract_strided_slice %250 {offsets = [0, 32], sizes = [8, 32], strides = [1, 1]} : vector<8x128xf32> to vector<8x32xf32>
    %253 = vector.extract_strided_slice %250 {offsets = [0, 64], sizes = [8, 32], strides = [1, 1]} : vector<8x128xf32> to vector<8x32xf32>
    %254 = vector.extract_strided_slice %250 {offsets = [0, 96], sizes = [8, 32], strides = [1, 1]} : vector<8x128xf32> to vector<8x32xf32>
    %255 = arith.mulf %252, %234 : vector<8x32xf32>
    %256 = arith.mulf %251, %253 : vector<8x32xf32>
    %257 = arith.addf %255, %256 : vector<8x32xf32>
    %258 = math.tanh %257 : vector<8x32xf32>
    %259 = arith.mulf %254, %258 : vector<8x32xf32>
    %260 = arith.truncf %97 : vector<8x32xf32> to vector<8x32xbf16>
    %cst_55 = arith.constant dense<0.000000e+00> : vector<8x128xf32>
    %261 = tpu.matmul %260, %184, %cst_55 {dimension_numbers = #tpu.dot_dimension_numbers<[1], [0], [0], [1], [0, 0, 1, 1], [], []>} : vector<8x32xbf16>, vector<32x128xbf16>, vector<8x128xf32> -> vector<8x128xf32>
    %262 = vector.broadcast %186 : vector<1x128xf32> to vector<8x128xf32>
    %263 = arith.addf %261, %262 : vector<8x128xf32>
    %264 = arith.truncf %259 : vector<8x32xf32> to vector<8x32xbf16>
    %cst_56 = arith.constant dense<0.000000e+00> : vector<8x128xf32>
    %265 = tpu.matmul %264, %185, %cst_56 {dimension_numbers = #tpu.dot_dimension_numbers<[1], [0], [0], [1], [0, 0, 1, 1], [], []>} : vector<8x32xbf16>, vector<32x128xbf16>, vector<8x128xf32> -> vector<8x128xf32>
    %266 = arith.addf %263, %265 : vector<8x128xf32>
    %267 = math.tanh %266 : vector<8x128xf32>
    %268 = arith.negf %266 : vector<8x128xf32>
    %269 = math.exp %268 : vector<8x128xf32>
    %cst_57 = arith.constant 1.000000e+00 : f32
    %270 = vector.broadcast %cst_57 : f32 to vector<8x128xf32>
    %271 = arith.addf %270, %269 : vector<8x128xf32>
    %272 = arith.divf %270, %271 : vector<8x128xf32>
    %273 = arith.select %5, %267, %272 : vector<8x128xi1>, vector<8x128xf32>
    %274 = vector.extract_strided_slice %273 {offsets = [0, 0], sizes = [8, 32], strides = [1, 1]} : vector<8x128xf32> to vector<8x32xf32>
    %275 = vector.extract_strided_slice %273 {offsets = [0, 32], sizes = [8, 32], strides = [1, 1]} : vector<8x128xf32> to vector<8x32xf32>
    %276 = vector.extract_strided_slice %273 {offsets = [0, 64], sizes = [8, 32], strides = [1, 1]} : vector<8x128xf32> to vector<8x32xf32>
    %277 = vector.extract_strided_slice %273 {offsets = [0, 96], sizes = [8, 32], strides = [1, 1]} : vector<8x128xf32> to vector<8x32xf32>
    %278 = arith.mulf %275, %257 : vector<8x32xf32>
    %279 = arith.mulf %274, %276 : vector<8x32xf32>
    %280 = arith.addf %278, %279 : vector<8x32xf32>
    %281 = math.tanh %280 : vector<8x32xf32>
    %282 = arith.mulf %277, %281 : vector<8x32xf32>
    %283 = arith.truncf %117 : vector<8x32xf32> to vector<8x32xbf16>
    %cst_58 = arith.constant dense<0.000000e+00> : vector<8x128xf32>
    %284 = tpu.matmul %283, %184, %cst_58 {dimension_numbers = #tpu.dot_dimension_numbers<[1], [0], [0], [1], [0, 0, 1, 1], [], []>} : vector<8x32xbf16>, vector<32x128xbf16>, vector<8x128xf32> -> vector<8x128xf32>
    %285 = vector.broadcast %186 : vector<1x128xf32> to vector<8x128xf32>
    %286 = arith.addf %284, %285 : vector<8x128xf32>
    %287 = arith.truncf %282 : vector<8x32xf32> to vector<8x32xbf16>
    %cst_59 = arith.constant dense<0.000000e+00> : vector<8x128xf32>
    %288 = tpu.matmul %287, %185, %cst_59 {dimension_numbers = #tpu.dot_dimension_numbers<[1], [0], [0], [1], [0, 0, 1, 1], [], []>} : vector<8x32xbf16>, vector<32x128xbf16>, vector<8x128xf32> -> vector<8x128xf32>
    %289 = arith.addf %286, %288 : vector<8x128xf32>
    %290 = math.tanh %289 : vector<8x128xf32>
    %291 = arith.negf %289 : vector<8x128xf32>
    %292 = math.exp %291 : vector<8x128xf32>
    %cst_60 = arith.constant 1.000000e+00 : f32
    %293 = vector.broadcast %cst_60 : f32 to vector<8x128xf32>
    %294 = arith.addf %293, %292 : vector<8x128xf32>
    %295 = arith.divf %293, %294 : vector<8x128xf32>
    %296 = arith.select %5, %290, %295 : vector<8x128xi1>, vector<8x128xf32>
    %297 = vector.extract_strided_slice %296 {offsets = [0, 0], sizes = [8, 32], strides = [1, 1]} : vector<8x128xf32> to vector<8x32xf32>
    %298 = vector.extract_strided_slice %296 {offsets = [0, 32], sizes = [8, 32], strides = [1, 1]} : vector<8x128xf32> to vector<8x32xf32>
    %299 = vector.extract_strided_slice %296 {offsets = [0, 64], sizes = [8, 32], strides = [1, 1]} : vector<8x128xf32> to vector<8x32xf32>
    %300 = vector.extract_strided_slice %296 {offsets = [0, 96], sizes = [8, 32], strides = [1, 1]} : vector<8x128xf32> to vector<8x32xf32>
    %301 = arith.mulf %298, %280 : vector<8x32xf32>
    %302 = arith.mulf %297, %299 : vector<8x32xf32>
    %303 = arith.addf %301, %302 : vector<8x32xf32>
    %304 = math.tanh %303 : vector<8x32xf32>
    %305 = arith.mulf %300, %304 : vector<8x32xf32>
    %306 = arith.truncf %137 : vector<8x32xf32> to vector<8x32xbf16>
    %cst_61 = arith.constant dense<0.000000e+00> : vector<8x128xf32>
    %307 = tpu.matmul %306, %184, %cst_61 {dimension_numbers = #tpu.dot_dimension_numbers<[1], [0], [0], [1], [0, 0, 1, 1], [], []>} : vector<8x32xbf16>, vector<32x128xbf16>, vector<8x128xf32> -> vector<8x128xf32>
    %308 = vector.broadcast %186 : vector<1x128xf32> to vector<8x128xf32>
    %309 = arith.addf %307, %308 : vector<8x128xf32>
    %310 = arith.truncf %305 : vector<8x32xf32> to vector<8x32xbf16>
    %cst_62 = arith.constant dense<0.000000e+00> : vector<8x128xf32>
    %311 = tpu.matmul %310, %185, %cst_62 {dimension_numbers = #tpu.dot_dimension_numbers<[1], [0], [0], [1], [0, 0, 1, 1], [], []>} : vector<8x32xbf16>, vector<32x128xbf16>, vector<8x128xf32> -> vector<8x128xf32>
    %312 = arith.addf %309, %311 : vector<8x128xf32>
    %313 = math.tanh %312 : vector<8x128xf32>
    %314 = arith.negf %312 : vector<8x128xf32>
    %315 = math.exp %314 : vector<8x128xf32>
    %cst_63 = arith.constant 1.000000e+00 : f32
    %316 = vector.broadcast %cst_63 : f32 to vector<8x128xf32>
    %317 = arith.addf %316, %315 : vector<8x128xf32>
    %318 = arith.divf %316, %317 : vector<8x128xf32>
    %319 = arith.select %5, %313, %318 : vector<8x128xi1>, vector<8x128xf32>
    %320 = vector.extract_strided_slice %319 {offsets = [0, 0], sizes = [8, 32], strides = [1, 1]} : vector<8x128xf32> to vector<8x32xf32>
    %321 = vector.extract_strided_slice %319 {offsets = [0, 32], sizes = [8, 32], strides = [1, 1]} : vector<8x128xf32> to vector<8x32xf32>
    %322 = vector.extract_strided_slice %319 {offsets = [0, 64], sizes = [8, 32], strides = [1, 1]} : vector<8x128xf32> to vector<8x32xf32>
    %323 = vector.extract_strided_slice %319 {offsets = [0, 96], sizes = [8, 32], strides = [1, 1]} : vector<8x128xf32> to vector<8x32xf32>
    %324 = arith.mulf %321, %303 : vector<8x32xf32>
    %325 = arith.mulf %320, %322 : vector<8x32xf32>
    %326 = arith.addf %324, %325 : vector<8x32xf32>
    %327 = math.tanh %326 : vector<8x32xf32>
    %328 = arith.mulf %323, %327 : vector<8x32xf32>
    %329 = arith.truncf %157 : vector<8x32xf32> to vector<8x32xbf16>
    %cst_64 = arith.constant dense<0.000000e+00> : vector<8x128xf32>
    %330 = tpu.matmul %329, %184, %cst_64 {dimension_numbers = #tpu.dot_dimension_numbers<[1], [0], [0], [1], [0, 0, 1, 1], [], []>} : vector<8x32xbf16>, vector<32x128xbf16>, vector<8x128xf32> -> vector<8x128xf32>
    %331 = vector.broadcast %186 : vector<1x128xf32> to vector<8x128xf32>
    %332 = arith.addf %330, %331 : vector<8x128xf32>
    %333 = arith.truncf %328 : vector<8x32xf32> to vector<8x32xbf16>
    %cst_65 = arith.constant dense<0.000000e+00> : vector<8x128xf32>
    %334 = tpu.matmul %333, %185, %cst_65 {dimension_numbers = #tpu.dot_dimension_numbers<[1], [0], [0], [1], [0, 0, 1, 1], [], []>} : vector<8x32xbf16>, vector<32x128xbf16>, vector<8x128xf32> -> vector<8x128xf32>
    %335 = arith.addf %332, %334 : vector<8x128xf32>
    %336 = math.tanh %335 : vector<8x128xf32>
    %337 = arith.negf %335 : vector<8x128xf32>
    %338 = math.exp %337 : vector<8x128xf32>
    %cst_66 = arith.constant 1.000000e+00 : f32
    %339 = vector.broadcast %cst_66 : f32 to vector<8x128xf32>
    %340 = arith.addf %339, %338 : vector<8x128xf32>
    %341 = arith.divf %339, %340 : vector<8x128xf32>
    %342 = arith.select %5, %336, %341 : vector<8x128xi1>, vector<8x128xf32>
    %343 = vector.extract_strided_slice %342 {offsets = [0, 0], sizes = [8, 32], strides = [1, 1]} : vector<8x128xf32> to vector<8x32xf32>
    %344 = vector.extract_strided_slice %342 {offsets = [0, 32], sizes = [8, 32], strides = [1, 1]} : vector<8x128xf32> to vector<8x32xf32>
    %345 = vector.extract_strided_slice %342 {offsets = [0, 64], sizes = [8, 32], strides = [1, 1]} : vector<8x128xf32> to vector<8x32xf32>
    %346 = vector.extract_strided_slice %342 {offsets = [0, 96], sizes = [8, 32], strides = [1, 1]} : vector<8x128xf32> to vector<8x32xf32>
    %347 = arith.mulf %344, %326 : vector<8x32xf32>
    %348 = arith.mulf %343, %345 : vector<8x32xf32>
    %349 = arith.addf %347, %348 : vector<8x32xf32>
    %350 = math.tanh %349 : vector<8x32xf32>
    %351 = arith.mulf %346, %350 : vector<8x32xf32>
    %352 = arith.truncf %177 : vector<8x32xf32> to vector<8x32xbf16>
    %cst_67 = arith.constant dense<0.000000e+00> : vector<8x128xf32>
    %353 = tpu.matmul %352, %184, %cst_67 {dimension_numbers = #tpu.dot_dimension_numbers<[1], [0], [0], [1], [0, 0, 1, 1], [], []>} : vector<8x32xbf16>, vector<32x128xbf16>, vector<8x128xf32> -> vector<8x128xf32>
    %354 = vector.broadcast %186 : vector<1x128xf32> to vector<8x128xf32>
    %355 = arith.addf %353, %354 : vector<8x128xf32>
    %356 = arith.truncf %351 : vector<8x32xf32> to vector<8x32xbf16>
    %cst_68 = arith.constant dense<0.000000e+00> : vector<8x128xf32>
    %357 = tpu.matmul %356, %185, %cst_68 {dimension_numbers = #tpu.dot_dimension_numbers<[1], [0], [0], [1], [0, 0, 1, 1], [], []>} : vector<8x32xbf16>, vector<32x128xbf16>, vector<8x128xf32> -> vector<8x128xf32>
    %358 = arith.addf %355, %357 : vector<8x128xf32>
    %359 = math.tanh %358 : vector<8x128xf32>
    %360 = arith.negf %358 : vector<8x128xf32>
    %361 = math.exp %360 : vector<8x128xf32>
    %cst_69 = arith.constant 1.000000e+00 : f32
    %362 = vector.broadcast %cst_69 : f32 to vector<8x128xf32>
    %363 = arith.addf %362, %361 : vector<8x128xf32>
    %364 = arith.divf %362, %363 : vector<8x128xf32>
    %365 = arith.select %5, %359, %364 : vector<8x128xi1>, vector<8x128xf32>
    %366 = vector.extract_strided_slice %365 {offsets = [0, 0], sizes = [8, 32], strides = [1, 1]} : vector<8x128xf32> to vector<8x32xf32>
    %367 = vector.extract_strided_slice %365 {offsets = [0, 32], sizes = [8, 32], strides = [1, 1]} : vector<8x128xf32> to vector<8x32xf32>
    %368 = vector.extract_strided_slice %365 {offsets = [0, 64], sizes = [8, 32], strides = [1, 1]} : vector<8x128xf32> to vector<8x32xf32>
    %369 = vector.extract_strided_slice %365 {offsets = [0, 96], sizes = [8, 32], strides = [1, 1]} : vector<8x128xf32> to vector<8x32xf32>
    %370 = arith.mulf %367, %349 : vector<8x32xf32>
    %371 = arith.mulf %366, %368 : vector<8x32xf32>
    %372 = arith.addf %370, %371 : vector<8x32xf32>
    %373 = math.tanh %372 : vector<8x32xf32>
    %374 = arith.mulf %369, %373 : vector<8x32xf32>
    %c1_70 = arith.constant 1 : index
    %c0_71 = arith.constant 0 : index
    %c0_72 = arith.constant 0 : index
    %375 = vector.load %arg12[%c1_70, %c0_71, %c0_72] : memref<2x8x32xf32, #tpu.memory_space<vmem>>, vector<1x8x32xf32>
    %376 = vector.shape_cast %375 : vector<1x8x32xf32> to vector<8x32xf32>
    %377 = vector.shape_cast %374 : vector<8x32xf32> to vector<1x8x32xf32>
    tpu.vector_store %arg12[%c1_70, %c0_71, %c0_72], %377 {strides = array<i32>} : memref<2x8x32xf32, #tpu.memory_space<vmem>>, vector<1x8x32xf32>,
    %c1_73 = arith.constant 1 : index
    %c0_74 = arith.constant 0 : index
    %c0_75 = arith.constant 0 : index
    %378 = vector.load %arg13[%c1_73, %c0_74, %c0_75] : memref<2x8x32xf32, #tpu.memory_space<vmem>>, vector<1x8x32xf32>
    %379 = vector.shape_cast %378 : vector<1x8x32xf32> to vector<8x32xf32>
    %380 = vector.shape_cast %372 : vector<8x32xf32> to vector<1x8x32xf32>
    tpu.vector_store %arg13[%c1_73, %c0_74, %c0_75], %380 {strides = array<i32>} : memref<2x8x32xf32, #tpu.memory_space<vmem>>, vector<1x8x32xf32>,
    %c0_76 = arith.constant 0 : index
    %c0_77 = arith.constant 0 : index
    %381 = vector.load %arg7[%c0_76, %c0_77] : memref<32x128xbf16, #tpu.memory_space<vmem>>, vector<32x128xbf16>
    %c0_78 = arith.constant 0 : index
    %c0_79 = arith.constant 0 : index
    %382 = vector.load %arg8[%c0_78, %c0_79] : memref<1x128xf32, #tpu.memory_space<vmem>>, vector<1x128xf32>
    %383 = arith.truncf %213 : vector<8x32xf32> to vector<8x32xbf16>
    %cst_80 = arith.constant dense<0.000000e+00> : vector<8x128xf32>
    %384 = tpu.matmul %383, %381, %cst_80 {dimension_numbers = #tpu.dot_dimension_numbers<[1], [0], [0], [1], [0, 0, 1, 1], [], []>} : vector<8x32xbf16>, vector<32x128xbf16>, vector<8x128xf32> -> vector<8x128xf32>
    %385 = vector.broadcast %382 : vector<1x128xf32> to vector<8x128xf32>
    %386 = arith.addf %384, %385 : vector<8x128xf32>
    %c0_81 = arith.constant 0 : index
    %c0_82 = arith.constant 0 : index
    %387 = vector.load %arg11[%c0_81, %c0_82] : memref<64x128xf32, #tpu.memory_space<vmem>>, vector<8x128xf32>
    tpu.vector_store %arg11[%c0_81, %c0_82], %386 {strides = array<i32>} : memref<64x128xf32, #tpu.memory_space<vmem>>, vector<8x128xf32>,
    %388 = arith.truncf %236 : vector<8x32xf32> to vector<8x32xbf16>
    %cst_83 = arith.constant dense<0.000000e+00> : vector<8x128xf32>
    %389 = tpu.matmul %388, %381, %cst_83 {dimension_numbers = #tpu.dot_dimension_numbers<[1], [0], [0], [1], [0, 0, 1, 1], [], []>} : vector<8x32xbf16>, vector<32x128xbf16>, vector<8x128xf32> -> vector<8x128xf32>
    %390 = vector.broadcast %382 : vector<1x128xf32> to vector<8x128xf32>
    %391 = arith.addf %389, %390 : vector<8x128xf32>
    %c8 = arith.constant 8 : index
    %c0_84 = arith.constant 0 : index
    %392 = vector.load %arg11[%c8, %c0_84] : memref<64x128xf32, #tpu.memory_space<vmem>>, vector<8x128xf32>
    tpu.vector_store %arg11[%c8, %c0_84], %391 {strides = array<i32>} : memref<64x128xf32, #tpu.memory_space<vmem>>, vector<8x128xf32>,
    %393 = arith.truncf %259 : vector<8x32xf32> to vector<8x32xbf16>
    %cst_85 = arith.constant dense<0.000000e+00> : vector<8x128xf32>
    %394 = tpu.matmul %393, %381, %cst_85 {dimension_numbers = #tpu.dot_dimension_numbers<[1], [0], [0], [1], [0, 0, 1, 1], [], []>} : vector<8x32xbf16>, vector<32x128xbf16>, vector<8x128xf32> -> vector<8x128xf32>
    %395 = vector.broadcast %382 : vector<1x128xf32> to vector<8x128xf32>
    %396 = arith.addf %394, %395 : vector<8x128xf32>
    %c16 = arith.constant 16 : index
    %c0_86 = arith.constant 0 : index
    %397 = vector.load %arg11[%c16, %c0_86] : memref<64x128xf32, #tpu.memory_space<vmem>>, vector<8x128xf32>
    tpu.vector_store %arg11[%c16, %c0_86], %396 {strides = array<i32>} : memref<64x128xf32, #tpu.memory_space<vmem>>, vector<8x128xf32>,
    %398 = arith.truncf %282 : vector<8x32xf32> to vector<8x32xbf16>
    %cst_87 = arith.constant dense<0.000000e+00> : vector<8x128xf32>
    %399 = tpu.matmul %398, %381, %cst_87 {dimension_numbers = #tpu.dot_dimension_numbers<[1], [0], [0], [1], [0, 0, 1, 1], [], []>} : vector<8x32xbf16>, vector<32x128xbf16>, vector<8x128xf32> -> vector<8x128xf32>
    %400 = vector.broadcast %382 : vector<1x128xf32> to vector<8x128xf32>
    %401 = arith.addf %399, %400 : vector<8x128xf32>
    %c24 = arith.constant 24 : index
    %c0_88 = arith.constant 0 : index
    %402 = vector.load %arg11[%c24, %c0_88] : memref<64x128xf32, #tpu.memory_space<vmem>>, vector<8x128xf32>
    tpu.vector_store %arg11[%c24, %c0_88], %401 {strides = array<i32>} : memref<64x128xf32, #tpu.memory_space<vmem>>, vector<8x128xf32>,
    %403 = arith.truncf %305 : vector<8x32xf32> to vector<8x32xbf16>
    %cst_89 = arith.constant dense<0.000000e+00> : vector<8x128xf32>
    %404 = tpu.matmul %403, %381, %cst_89 {dimension_numbers = #tpu.dot_dimension_numbers<[1], [0], [0], [1], [0, 0, 1, 1], [], []>} : vector<8x32xbf16>, vector<32x128xbf16>, vector<8x128xf32> -> vector<8x128xf32>
    %405 = vector.broadcast %382 : vector<1x128xf32> to vector<8x128xf32>
    %406 = arith.addf %404, %405 : vector<8x128xf32>
    %c32 = arith.constant 32 : index
    %c0_90 = arith.constant 0 : index
    %407 = vector.load %arg11[%c32, %c0_90] : memref<64x128xf32, #tpu.memory_space<vmem>>, vector<8x128xf32>
    tpu.vector_store %arg11[%c32, %c0_90], %406 {strides = array<i32>} : memref<64x128xf32, #tpu.memory_space<vmem>>, vector<8x128xf32>,
    %408 = arith.truncf %328 : vector<8x32xf32> to vector<8x32xbf16>
    %cst_91 = arith.constant dense<0.000000e+00> : vector<8x128xf32>
    %409 = tpu.matmul %408, %381, %cst_91 {dimension_numbers = #tpu.dot_dimension_numbers<[1], [0], [0], [1], [0, 0, 1, 1], [], []>} : vector<8x32xbf16>, vector<32x128xbf16>, vector<8x128xf32> -> vector<8x128xf32>
    %410 = vector.broadcast %382 : vector<1x128xf32> to vector<8x128xf32>
    %411 = arith.addf %409, %410 : vector<8x128xf32>
    %c40 = arith.constant 40 : index
    %c0_92 = arith.constant 0 : index
    %412 = vector.load %arg11[%c40, %c0_92] : memref<64x128xf32, #tpu.memory_space<vmem>>, vector<8x128xf32>
    tpu.vector_store %arg11[%c40, %c0_92], %411 {strides = array<i32>} : memref<64x128xf32, #tpu.memory_space<vmem>>, vector<8x128xf32>,
    %413 = arith.truncf %351 : vector<8x32xf32> to vector<8x32xbf16>
    %cst_93 = arith.constant dense<0.000000e+00> : vector<8x128xf32>
    %414 = tpu.matmul %413, %381, %cst_93 {dimension_numbers = #tpu.dot_dimension_numbers<[1], [0], [0], [1], [0, 0, 1, 1], [], []>} : vector<8x32xbf16>, vector<32x128xbf16>, vector<8x128xf32> -> vector<8x128xf32>
    %415 = vector.broadcast %382 : vector<1x128xf32> to vector<8x128xf32>
    %416 = arith.addf %414, %415 : vector<8x128xf32>
    %c48 = arith.constant 48 : index
    %c0_94 = arith.constant 0 : index
    %417 = vector.load %arg11[%c48, %c0_94] : memref<64x128xf32, #tpu.memory_space<vmem>>, vector<8x128xf32>
    tpu.vector_store %arg11[%c48, %c0_94], %416 {strides = array<i32>} : memref<64x128xf32, #tpu.memory_space<vmem>>, vector<8x128xf32>,
    %418 = arith.truncf %374 : vector<8x32xf32> to vector<8x32xbf16>
    %cst_95 = arith.constant dense<0.000000e+00> : vector<8x128xf32>
    %419 = tpu.matmul %418, %381, %cst_95 {dimension_numbers = #tpu.dot_dimension_numbers<[1], [0], [0], [1], [0, 0, 1, 1], [], []>} : vector<8x32xbf16>, vector<32x128xbf16>, vector<8x128xf32> -> vector<8x128xf32>
    %420 = vector.broadcast %382 : vector<1x128xf32> to vector<8x128xf32>
    %421 = arith.addf %419, %420 : vector<8x128xf32>
    %c56 = arith.constant 56 : index
    %c0_96 = arith.constant 0 : index
    %422 = vector.load %arg11[%c56, %c0_96] : memref<64x128xf32, #tpu.memory_space<vmem>>, vector<8x128xf32>
    tpu.vector_store %arg11[%c56, %c0_96], %421 {strides = array<i32>} : memref<64x128xf32, #tpu.memory_space<vmem>>, vector<8x128xf32>,
    return
  }
}

</mosaic_0001>

<llo_original>
// kernel: tpu_custom_call.1
$region0: #{tpu_custom_call.1}
  #allocation0 [shape = 'u32[]', space=smem, size = 0x4, offset = 0x4, fixed_abs, tag = 'smem constant byte address 0x4 - core index']
  #allocation1 [shape = 'u32[144,128]{1,0:T(1,128)}', space=vmem, size = 0x12000, scoped, tag = 'internal scratch']
  %s0 = inlined_call_operand.vmem [shape: f32[64,32], index: 0, kind: input, shape index: {}]
  %s1 = inlined_call_operand.vmem [shape: bf16[32,128], index: 1, kind: input, shape index: {}]
  %s2 = inlined_call_operand.vmem [shape: bf16[32,128], index: 2, kind: input, shape index: {}]
  %s3 = inlined_call_operand.vmem [shape: f32[1,128], index: 3, kind: input, shape index: {}]
  %s4 = inlined_call_operand.vmem [shape: bf16[32,128], index: 4, kind: input, shape index: {}]
  %s5 = inlined_call_operand.vmem [shape: bf16[32,128], index: 5, kind: input, shape index: {}]
  %s6 = inlined_call_operand.vmem [shape: f32[1,128], index: 6, kind: input, shape index: {}]
  %s7 = inlined_call_operand.vmem [shape: bf16[32,128], index: 7, kind: input, shape index: {}]
  %s8 = inlined_call_operand.vmem [shape: f32[1,128], index: 8, kind: input, shape index: {}]
  %s9 = inlined_call_operand.vmem [shape: f32[2,8,32], index: 9, kind: input, shape index: {}]
  %s10 = inlined_call_operand.vmem [shape: f32[2,8,32], index: 10, kind: input, shape index: {}]
  %s11 = inlined_call_operand.hbm [shape: f32[64,128], index: 11, kind: output, shape index: {0}]
  %s12 = inlined_call_operand.hbm [shape: f32[2,8,32], index: 12, kind: output, shape index: {1}]
  %s13 = inlined_call_operand.hbm [shape: f32[2,8,32], index: 13, kind: output, shape index: {2}]
  %14 = xla_tuple %s11, %s12, %s13
  %s15 = sld [smem:[#allocation0]]
  $region70: #{tpu_custom_call.1} parent=0
    _
  %s17 = ssub.s32 1, %s15
  %s18 = scalar_select 0, %s17, %s15
  $region1: #{tpu_custom_call.1} parent=0
    #allocation2 [shape = 'u8[32768]{0}', space=vmem, size = 0x8000, scoped, tag = 'output window, operand 0, single buffered']
    #allocation3 [shape = 's32[1]{0}', space=sflag, size = 0x4, scoped, tag = 'scoped memory for tpu_custom_call.1']
    #allocation4 [shape = 'u8[8192]{0}', space=vmem, size = 0x2000, scoped, tag = 'output window, operand 1, single buffered']
    #allocation5 [shape = 's32[1]{0}', space=sflag, size = 0x4, scoped, tag = 'scoped memory for tpu_custom_call.1']
    #allocation6 [shape = 'u8[8192]{0}', space=vmem, size = 0x2000, scoped, tag = 'output window, operand 2, single buffered']
    %19 = vsyncpa [#allocation3], 0
    %20 = vsyncpa [#allocation5], 0
    // Predicated region
    $region2: #{tpu_custom_call.1} parent=1 // pred_check
      _
    $region3: #{tpu_custom_call.1} parent=1 // pred_check_branch
      %22 = sbr.rel (0) target = $region5
    $region4: #{tpu_custom_call.1} parent=1 // pred_region
      _
    $region5: #{tpu_custom_call.1} parent=1 // pred_fallthru
      _
    // Predicated region
    $region6: #{tpu_custom_call.1} parent=1 // pred_check
      _
    $region7: #{tpu_custom_call.1} parent=1 // pred_check_branch
      %24 = sbr.rel (0) target = $region9
    $region8: #{tpu_custom_call.1} parent=1 // pred_region
      _
    $region9: #{tpu_custom_call.1} parent=1 // pred_fallthru
      _
    // Predicated region
    $region10: #{tpu_custom_call.1} parent=1 // pred_check
      _
    $region11: #{tpu_custom_call.1} parent=1 // pred_check_branch
      %26 = sbr.rel (0) target = $region13
    $region12: #{tpu_custom_call.1} parent=1 // pred_region
      _
    $region13: #{tpu_custom_call.1} parent=1 // pred_fallthru
      _
    // Predicated region
    $region14: #{tpu_custom_call.1} parent=1 // pred_check
      _
    $region15: #{tpu_custom_call.1} parent=1 // pred_check_branch
      %28 = sbr.rel (0) target = $region17
    $region16: #{tpu_custom_call.1} parent=1 // pred_region
      _
    $region17: #{tpu_custom_call.1} parent=1 // pred_fallthru
      _
    // Predicated region
    $region18: #{tpu_custom_call.1} parent=1 // pred_check
      _
    $region19: #{tpu_custom_call.1} parent=1 // pred_check_branch
      %30 = sbr.rel (0) target = $region21
    $region20: #{tpu_custom_call.1} parent=1 // pred_region
      _
    $region21: #{tpu_custom_call.1} parent=1 // pred_fallthru
      _
    // Predicated region
    $region22: #{tpu_custom_call.1} parent=1 // pred_check
      _
    $region23: #{tpu_custom_call.1} parent=1 // pred_check_branch
      %32 = sbr.rel (0) target = $region25
    $region24: #{tpu_custom_call.1} parent=1 // pred_region
      _
    $region25: #{tpu_custom_call.1} parent=1 // pred_fallthru
      _
    // Predicated region
    $region26: #{tpu_custom_call.1} parent=1 // pred_check
      _
    $region27: #{tpu_custom_call.1} parent=1 // pred_check_branch
      %34 = sbr.rel (0) target = $region29
    $region28: #{tpu_custom_call.1} parent=1 // pred_region
      _
    $region29: #{tpu_custom_call.1} parent=1 // pred_fallthru
      _
    // Predicated region
    $region30: #{tpu_custom_call.1} parent=1 // pred_check
      _
    $region31: #{tpu_custom_call.1} parent=1 // pred_check_branch
      %36 = sbr.rel (0) target = $region33
    $region32: #{tpu_custom_call.1} parent=1 // pred_region
      _
    $region33: #{tpu_custom_call.1} parent=1 // pred_fallthru
      _
    // Predicated region
    $region34: #{tpu_custom_call.1} parent=1 // pred_check
      _
    $region35: #{tpu_custom_call.1} parent=1 // pred_check_branch
      %38 = sbr.rel (0) target = $region37
    $region36: #{tpu_custom_call.1} parent=1 // pred_region
      _
    $region37: #{tpu_custom_call.1} parent=1 // pred_fallthru
      _
    // Predicated region
    $region38: #{tpu_custom_call.1} parent=1 // pred_check
      _
    $region39: #{tpu_custom_call.1} parent=1 // pred_check_branch
      %40 = sbr.rel (0) target = $region41
    $region40: #{tpu_custom_call.1} parent=1 // pred_region
      _
    $region41: #{tpu_custom_call.1} parent=1 // pred_fallthru
      _
    // Predicated region
    $region42: #{tpu_custom_call.1} parent=1 // pred_check
      _
    $region43: #{tpu_custom_call.1} parent=1 // pred_check_branch
      %42 = sbr.rel (0) target = $region45
    $region44: #{tpu_custom_call.1} parent=1 // pred_region
      _
    $region45: #{tpu_custom_call.1} parent=1 // pred_fallthru
      _
    %v44 = vlaneseq
    %v45 = vand.u32 %v44, 127
    %vm46 = vcmp.ge.s32.totalorder %v45, 64
    %vm47 = vcmp.lt.s32.totalorder %v45, 96
    %vm48 = vmand %vm46, %vm47
    %v49 = vld [vmem:[%s1] sm:$0xf]
    %v50 = vld [vmem:[%s1 + $0x4] sm:$0xf]
    %v51 = vld [vmem:[%s1 + $0x8] sm:$0xf]
    %v52 = vld [vmem:[%s1 + $0xc] sm:$0xf]
    %v53 = vld [vmem:[%s2] sm:$0xf]
    %v54 = vld [vmem:[%s2 + $0x4] sm:$0xf]
    %v55 = vld [vmem:[%s2 + $0x8] sm:$0xf]
    %v56 = vld [vmem:[%s2 + $0xc] sm:$0xf]
    %v57 = vld [vmem:[%s3] sm:$0x1]
    %v58 = vld [vmem:[%s0] sm:$0xff]
    %v59 = vld [vmem:[%s0 + $0x8] sm:$0xff]
    %v60 = vld [vmem:[%s0 + $0x10] sm:$0xff]
    %v61 = vld [vmem:[%s0 + $0x18] sm:$0xff]
    %v62 = vld [vmem:[%s0 + $0x20] sm:$0xff]
    %v63 = vld [vmem:[%s0 + $0x28] sm:$0xff]
    %v64 = vld [vmem:[%s0 + $0x30] sm:$0xff]
    %v65 = vld [vmem:[%s0 + $0x38] sm:$0xff]
    %v66 = vpack.c.bf16 %v59, %v58
    %v67 = vpack.c.bf16 %v61, %v60
    %v68 = vpack.c.bf16 %v63, %v62
    %v69 = vpack.c.bf16 %v65, %v64
    %v71 = vlaneseq
    %v72 = vshrl.u32 %v71, 7
    %v73 = vsub.s32 0, %v72
    %v74 = vrot.slane %v57, %v73
    %v80 = vunpack.c.l.b16 %v49
    %v81 = vunpack.c.l.b16 %v50
    %v82 = vunpack.c.l.b16 %v51
    %v83 = vunpack.c.l.b16 %v52
    %v84 = vpack.c.b16 %v81, %v80
    %v85 = vpack.c.b16 %v83, %v82
    %vm88 = vcmask 261120
    %v90 = vsel %vm88, %v66, 0
    %v93 = vsel %vm88, %v67, 0
    %v96 = vsel %vm88, %v68, 0
    %v99 = vsel %vm88, %v69, 0
    %101 = vmatprep.subr.bf16.mxu0 0
    %102 = vmatpush1.bf16.msra.mxu0 %v84
    %103 = vmatprep.subr.bf16.mxu0 0
    %104 = vmatpush1.bf16.msra.mxu0 %v85
    %105 = vmatprep.subr.bf16.mxu0 0
    %106 = vmatpush1.bf16.msra.mxu0 0
    %107 = vmatprep.subr.bf16.mxu0 0
    %108 = vmatpush1.bf16.msra.mxu0 0
    %109 = vmatprep.subr.bf16.mxu0 0
    %110 = vmatpush1.bf16.msra.mxu0 0
    %111 = vmatprep.subr.bf16.mxu0 0
    %112 = vmatpush1.bf16.msra.mxu0 0
    %113 = vmatprep.subr.bf16.mxu0 0
    %114 = vmatpush1.bf16.msra.mxu0 0
    %115 = vmatprep.subr.bf16.mxu0 0
    %116 = vmatpush1.bf16.msra.mxu0 0
    %117 = vmatprep.subr.bf16.mxu0 0
    %118 = vmatpush1.bf16.msra.mxu0 0
    %119 = vmatprep.subr.bf16.mxu0 0
    %120 = vmatpush1.bf16.msra.mxu0 0
    %121 = vmatprep.subr.bf16.mxu0 0
    %122 = vmatpush1.bf16.msra.mxu0 0
    %123 = vmatprep.subr.bf16.mxu0 0
    %124 = vmatpush1.bf16.msra.mxu0 0
    %125 = vmatprep.subr.bf16.mxu0 0
    %126 = vmatpush1.bf16.msra.mxu0 0
    %127 = vmatprep.subr.bf16.mxu0 0
    %128 = vmatpush1.bf16.msra.mxu0 0
    %129 = vmatprep.subr.bf16.mxu0 0
    %130 = vmatpush1.bf16.msra.mxu0 0
    %131 = vmatprep.subr.bf16.mxu0 0
    %132 = vmatpush1.bf16.msra.mxu0 0
    %133 = vmatprep.mubr.bf16.mxu0 0
    %134 = vmatmul.mubr.bf16.gmra.mrb[0].mxu0 %v90
    %v135 = vpop.f32.mrb[0].mxu0
    %v136 = vadd.f32 %v74, %v135
    %v137 = vpop.f32.mrb[0].mxu0
    %v138 = vpop.f32.mrb[0].mxu0
    %v139 = vadd.f32 %v74, %v138
    %v140 = vpop.f32.mrb[0].mxu0
    %141 = vmatprep.mubr.bf16.mxu0 0
    %142 = vmatmul.mubr.bf16.gmra.mrb[0].mxu0 %v93
    %v143 = vpop.f32.mrb[0].mxu0
    %v144 = vadd.f32 %v74, %v143
    %v145 = vpop.f32.mrb[0].mxu0
    %v146 = vpop.f32.mrb[0].mxu0
    %v147 = vadd.f32 %v74, %v146
    %v148 = vpop.f32.mrb[0].mxu0
    %149 = vmatprep.mubr.bf16.mxu0 0
    %150 = vmatmul.mubr.bf16.gmra.mrb[0].mxu0 %v96
    %v151 = vpop.f32.mrb[0].mxu0
    %v152 = vadd.f32 %v74, %v151
    %v153 = vpop.f32.mrb[0].mxu0
    %v154 = vpop.f32.mrb[0].mxu0
    %v155 = vadd.f32 %v74, %v154
    %v156 = vpop.f32.mrb[0].mxu0
    %157 = vmatprep.mubr.bf16.mxu0 0
    %158 = vmatmul.mubr.bf16.gmra.mrb[0].mxu0 %v99
    %v159 = vpop.f32.mrb[0].mxu0
    %v160 = vadd.f32 %v74, %v159
    %v161 = vpop.f32.mrb[0].mxu0
    %v162 = vpop.f32.mrb[0].mxu0
    %v163 = vadd.f32 %v74, %v162
    %v164 = vpop.f32.mrb[0].mxu0
    %165 = vdwg.mxu0
    %v166 = vld [vmem:[%s9] sm:$0xff]
    %v167 = vld [vmem:[%s10] sm:$0xff]
    %v168 = vpack.c.bf16 %v166, %v166
    %v173 = vunpack.c.l.b16 %v53
    %v174 = vunpack.c.l.b16 %v54
    %v175 = vunpack.c.l.b16 %v55
    %v176 = vunpack.c.l.b16 %v56
    %v177 = vpack.c.b16 %v174, %v173
    %v178 = vpack.c.b16 %v176, %v175
    %v182 = vsel %vm88, %v168, 0
    %184 = vmatprep.subr.bf16.mxu0 0
    %185 = vmatpush1.bf16.msra.mxu0 %v177
    %186 = vmatprep.subr.bf16.mxu0 0
    %187 = vmatpush1.bf16.msra.mxu0 %v178
    %188 = vmatprep.subr.bf16.mxu0 0
    %189 = vmatpush1.bf16.msra.mxu0 0
    %190 = vmatprep.subr.bf16.mxu0 0
    %191 = vmatpush1.bf16.msra.mxu0 0
    %192 = vmatprep.subr.bf16.mxu0 0
    %193 = vmatpush1.bf16.msra.mxu0 0
    %194 = vmatprep.subr.bf16.mxu0 0
    %195 = vmatpush1.bf16.msra.mxu0 0
    %196 = vmatprep.subr.bf16.mxu0 0
    %197 = vmatpush1.bf16.msra.mxu0 0
    %198 = vmatprep.subr.bf16.mxu0 0
    %199 = vmatpush1.bf16.msra.mxu0 0
    %200 = vmatprep.subr.bf16.mxu0 0
    %201 = vmatpush1.bf16.msra.mxu0 0
    %202 = vmatprep.subr.bf16.mxu0 0
    %203 = vmatpush1.bf16.msra.mxu0 0
    %204 = vmatprep.subr.bf16.mxu0 0
    %205 = vmatpush1.bf16.msra.mxu0 0
    %206 = vmatprep.subr.bf16.mxu0 0
    %207 = vmatpush1.bf16.msra.mxu0 0
    %208 = vmatprep.subr.bf16.mxu0 0
    %209 = vmatpush1.bf16.msra.mxu0 0
    %210 = vmatprep.subr.bf16.mxu0 0
    %211 = vmatpush1.bf16.msra.mxu0 0
    %212 = vmatprep.subr.bf16.mxu0 0
    %213 = vmatpush1.bf16.msra.mxu0 0
    %214 = vmatprep.subr.bf16.mxu0 0
    %215 = vmatpush1.bf16.msra.mxu0 0
    %216 = vmatprep.mubr.bf16.mxu0 0
    %217 = vmatmul.mubr.bf16.gmra.mrb[0].mxu0 %v182
    %v218 = vpop.f32.mrb[0].mxu0
    %v219 = vadd.f32 0.0, %v218
    %v220 = vpop.f32.mrb[0].mxu0
    %v221 = vpop.f32.mrb[0].mxu0
    %v222 = vpop.f32.mrb[0].mxu0
    %223 = vdwg.mxu0
    %v224 = vadd.f32 %v136, %v219
    %v225 = vtanh.pop %v224
    %v226 = vxor.u32 %v224, 2147483648
    %v227 = vmul.f32 %v226, 1.442695
    %v228 = vpow.pop %v227
    %v229 = vadd.f32 %v228, 1.0
    %v230 = vrcp.pop %v229
    %v231 = vmul.f32 1.0, %v230
    %v232 = vsel %vm48, %v225, %v231
    %234 = vrot.lane.b32.xlu0 %v167, 32
    %v235 = vpop.permute.xlu0 %234
    %v237 = vmul.f32 %v232, %v235
    %239 = vrot.lane.b32.xlu0 %v232, 64
    %v240 = vpop.permute.xlu0 %239
    %v242 = vmul.f32 %v232, %v240
    %244 = vrot.lane.b32.xlu0 %v242, 32
    %v245 = vpop.permute.xlu0 %244
    %v247 = vadd.f32 %v237, %v245
    %v248 = vtanh.pop %v247
    %250 = vrot.lane.b32.xlu0 %v248, 64
    %v251 = vpop.permute.xlu0 %250
    %v253 = vmul.f32 %v232, %v251
    %v254 = vpack.c.bf16 %v253, %v253
    %256 = vrot.lane.b32.xlu0 %v254, 32
    %v257 = vpop.permute.xlu0 %256
    %v259 = vsel %vm88, %v257, 0
    %261 = vmatprep.subr.bf16.mxu0 0
    %262 = vmatpush1.bf16.msra.mxu0 %v177
    %263 = vmatprep.subr.bf16.mxu0 0
    %264 = vmatpush1.bf16.msra.mxu0 %v178
    %265 = vmatprep.subr.bf16.mxu0 0
    %266 = vmatpush1.bf16.msra.mxu0 0
    %267 = vmatprep.subr.bf16.mxu0 0
    %268 = vmatpush1.bf16.msra.mxu0 0
    %269 = vmatprep.subr.bf16.mxu0 0
    %270 = vmatpush1.bf16.msra.mxu0 0
    %271 = vmatprep.subr.bf16.mxu0 0
    %272 = vmatpush1.bf16.msra.mxu0 0
    %273 = vmatprep.subr.bf16.mxu0 0
    %274 = vmatpush1.bf16.msra.mxu0 0
    %275 = vmatprep.subr.bf16.mxu0 0
    %276 = vmatpush1.bf16.msra.mxu0 0
    %277 = vmatprep.subr.bf16.mxu0 0
    %278 = vmatpush1.bf16.msra.mxu0 0
    %279 = vmatprep.subr.bf16.mxu0 0
    %280 = vmatpush1.bf16.msra.mxu0 0
    %281 = vmatprep.subr.bf16.mxu0 0
    %282 = vmatpush1.bf16.msra.mxu0 0
    %283 = vmatprep.subr.bf16.mxu0 0
    %284 = vmatpush1.bf16.msra.mxu0 0
    %285 = vmatprep.subr.bf16.mxu0 0
    %286 = vmatpush1.bf16.msra.mxu0 0
    %287 = vmatprep.subr.bf16.mxu0 0
    %288 = vmatpush1.bf16.msra.mxu0 0
    %289 = vmatprep.subr.bf16.mxu0 0
    %290 = vmatpush1.bf16.msra.mxu0 0
    %291 = vmatprep.subr.bf16.mxu0 0
    %292 = vmatpush1.bf16.msra.mxu0 0
    %293 = vmatprep.mubr.bf16.mxu0 0
    %294 = vmatmul.mubr.bf16.gmra.mrb[0].mxu0 %v259
    %v295 = vpop.f32.mrb[0].mxu0
    %v296 = vadd.f32 0.0, %v295
    %v297 = vpop.f32.mrb[0].mxu0
    %v298 = vpop.f32.mrb[0].mxu0
    %v299 = vpop.f32.mrb[0].mxu0
    %300 = vdwg.mxu0
    %v301 = vadd.f32 %v139, %v296
    %v302 = vtanh.pop %v301
    %v303 = vxor.u32 %v301, 2147483648
    %v304 = vmul.f32 %v303, 1.442695
    %v305 = vpow.pop %v304
    %v306 = vadd.f32 %v305, 1.0
    %v307 = vrcp.pop %v306
    %v308 = vmul.f32 1.0, %v307
    %v309 = vsel %vm48, %v302, %v308
    %v310 = vmul.f32 %v309, %v247
    %312 = vrot.lane.b32.xlu0 %v309, 64
    %v313 = vpop.permute.xlu0 %312
    %v315 = vmul.f32 %v309, %v313
    %317 = vrot.lane.b32.xlu0 %v315, 32
    %v318 = vpop.permute.xlu0 %317
    %v320 = vadd.f32 %v310, %v318
    %v321 = vtanh.pop %v320
    %323 = vrot.lane.b32.xlu0 %v321, 64
    %v324 = vpop.permute.xlu0 %323
    %v326 = vmul.f32 %v309, %v324
    %v327 = vpack.c.bf16 %v326, %v326
    %329 = vrot.lane.b32.xlu0 %v327, 32
    %v330 = vpop.permute.xlu0 %329
    %v332 = vsel %vm88, %v330, 0
    %334 = vmatprep.subr.bf16.mxu0 0
    %335 = vmatpush1.bf16.msra.mxu0 %v177
    %336 = vmatprep.subr.bf16.mxu0 0
    %337 = vmatpush1.bf16.msra.mxu0 %v178
    %338 = vmatprep.subr.bf16.mxu0 0
    %339 = vmatpush1.bf16.msra.mxu0 0
    %340 = vmatprep.subr.bf16.mxu0 0
    %341 = vmatpush1.bf16.msra.mxu0 0
    %342 = vmatprep.subr.bf16.mxu0 0
    %343 = vmatpush1.bf16.msra.mxu0 0
    %344 = vmatprep.subr.bf16.mxu0 0
    %345 = vmatpush1.bf16.msra.mxu0 0
    %346 = vmatprep.subr.bf16.mxu0 0
    %347 = vmatpush1.bf16.msra.mxu0 0
    %348 = vmatprep.subr.bf16.mxu0 0
    %349 = vmatpush1.bf16.msra.mxu0 0
    %350 = vmatprep.subr.bf16.mxu0 0
    %351 = vmatpush1.bf16.msra.mxu0 0
    %352 = vmatprep.subr.bf16.mxu0 0
    %353 = vmatpush1.bf16.msra.mxu0 0
    %354 = vmatprep.subr.bf16.mxu0 0
    %355 = vmatpush1.bf16.msra.mxu0 0
    %356 = vmatprep.subr.bf16.mxu0 0
    %357 = vmatpush1.bf16.msra.mxu0 0
    %358 = vmatprep.subr.bf16.mxu0 0
    %359 = vmatpush1.bf16.msra.mxu0 0
    %360 = vmatprep.subr.bf16.mxu0 0
    %361 = vmatpush1.bf16.msra.mxu0 0
    %362 = vmatprep.subr.bf16.mxu0 0
    %363 = vmatpush1.bf16.msra.mxu0 0
    %364 = vmatprep.subr.bf16.mxu0 0
    %365 = vmatpush1.bf16.msra.mxu0 0
    %366 = vmatprep.mubr.bf16.mxu0 0
    %367 = vmatmul.mubr.bf16.gmra.mrb[0].mxu0 %v332
    %v368 = vpop.f32.mrb[0].mxu0
    %v369 = vadd.f32 0.0, %v368
    %v370 = vpop.f32.mrb[0].mxu0
    %v371 = vpop.f32.mrb[0].mxu0
    %v372 = vpop.f32.mrb[0].mxu0
    %373 = vdwg.mxu0
    %v374 = vadd.f32 %v144, %v369
    %v375 = vtanh.pop %v374
    %v376 = vxor.u32 %v374, 2147483648
    %v377 = vmul.f32 %v376, 1.442695
    %v378 = vpow.pop %v377
    %v379 = vadd.f32 %v378, 1.0
    %v380 = vrcp.pop %v379
    %v381 = vmul.f32 1.0, %v380
    %v382 = vsel %vm48, %v375, %v381
    %v383 = vmul.f32 %v382, %v320
    %385 = vrot.lane.b32.xlu0 %v382, 64
    %v386 = vpop.permute.xlu0 %385
    %v388 = vmul.f32 %v382, %v386
    %390 = vrot.lane.b32.xlu0 %v388, 32
    %v391 = vpop.permute.xlu0 %390
    %v393 = vadd.f32 %v383, %v391
    %v394 = vtanh.pop %v393
    %396 = vrot.lane.b32.xlu0 %v394, 64
    %v397 = vpop.permute.xlu0 %396
    %v399 = vmul.f32 %v382, %v397
    %v400 = vpack.c.bf16 %v399, %v399
    %402 = vrot.lane.b32.xlu0 %v400, 32
    %v403 = vpop.permute.xlu0 %402
    %v405 = vsel %vm88, %v403, 0
    %407 = vmatprep.subr.bf16.mxu0 0
    %408 = vmatpush1.bf16.msra.mxu0 %v177
    %409 = vmatprep.subr.bf16.mxu0 0
    %410 = vmatpush1.bf16.msra.mxu0 %v178
    %411 = vmatprep.subr.bf16.mxu0 0
    %412 = vmatpush1.bf16.msra.mxu0 0
    %413 = vmatprep.subr.bf16.mxu0 0
    %414 = vmatpush1.bf16.msra.mxu0 0
    %415 = vmatprep.subr.bf16.mxu0 0
    %416 = vmatpush1.bf16.msra.mxu0 0
    %417 = vmatprep.subr.bf16.mxu0 0
    %418 = vmatpush1.bf16.msra.mxu0 0
    %419 = vmatprep.subr.bf16.mxu0 0
    %420 = vmatpush1.bf16.msra.mxu0 0
    %421 = vmatprep.subr.bf16.mxu0 0
    %422 = vmatpush1.bf16.msra.mxu0 0
    %423 = vmatprep.subr.bf16.mxu0 0
    %424 = vmatpush1.bf16.msra.mxu0 0
    %425 = vmatprep.subr.bf16.mxu0 0
    %426 = vmatpush1.bf16.msra.mxu0 0
    %427 = vmatprep.subr.bf16.mxu0 0
    %428 = vmatpush1.bf16.msra.mxu0 0
    %429 = vmatprep.subr.bf16.mxu0 0
    %430 = vmatpush1.bf16.msra.mxu0 0
    %431 = vmatprep.subr.bf16.mxu0 0
    %432 = vmatpush1.bf16.msra.mxu0 0
    %433 = vmatprep.subr.bf16.mxu0 0
    %434 = vmatpush1.bf16.msra.mxu0 0
    %435 = vmatprep.subr.bf16.mxu0 0
    %436 = vmatpush1.bf16.msra.mxu0 0
    %437 = vmatprep.subr.bf16.mxu0 0
    %438 = vmatpush1.bf16.msra.mxu0 0
    %439 = vmatprep.mubr.bf16.mxu0 0
    %440 = vmatmul.mubr.bf16.gmra.mrb[0].mxu0 %v405
    %v441 = vpop.f32.mrb[0].mxu0
    %v442 = vadd.f32 0.0, %v441
    %v443 = vpop.f32.mrb[0].mxu0
    %v444 = vpop.f32.mrb[0].mxu0
    %v445 = vpop.f32.mrb[0].mxu0
    %446 = vdwg.mxu0
    %v447 = vadd.f32 %v147, %v442
    %v448 = vtanh.pop %v447
    %v449 = vxor.u32 %v447, 2147483648
    %v450 = vmul.f32 %v449, 1.442695
    %v451 = vpow.pop %v450
    %v452 = vadd.f32 %v451, 1.0
    %v453 = vrcp.pop %v452
    %v454 = vmul.f32 1.0, %v453
    %v455 = vsel %vm48, %v448, %v454
    %v456 = vmul.f32 %v455, %v393
    %458 = vrot.lane.b32.xlu0 %v455, 64
    %v459 = vpop.permute.xlu0 %458
    %v461 = vmul.f32 %v455, %v459
    %463 = vrot.lane.b32.xlu0 %v461, 32
    %v464 = vpop.permute.xlu0 %463
    %v466 = vadd.f32 %v456, %v464
    %v467 = vtanh.pop %v466
    %469 = vrot.lane.b32.xlu0 %v467, 64
    %v470 = vpop.permute.xlu0 %469
    %v472 = vmul.f32 %v455, %v470
    %v473 = vpack.c.bf16 %v472, %v472
    %475 = vrot.lane.b32.xlu0 %v473, 32
    %v476 = vpop.permute.xlu0 %475
    %v478 = vsel %vm88, %v476, 0
    %480 = vmatprep.subr.bf16.mxu0 0
    %481 = vmatpush1.bf16.msra.mxu0 %v177
    %482 = vmatprep.subr.bf16.mxu0 0
    %483 = vmatpush1.bf16.msra.mxu0 %v178
    %484 = vmatprep.subr.bf16.mxu0 0
    %485 = vmatpush1.bf16.msra.mxu0 0
    %486 = vmatprep.subr.bf16.mxu0 0
    %487 = vmatpush1.bf16.msra.mxu0 0
    %488 = vmatprep.subr.bf16.mxu0 0
    %489 = vmatpush1.bf16.msra.mxu0 0
    %490 = vmatprep.subr.bf16.mxu0 0
    %491 = vmatpush1.bf16.msra.mxu0 0
    %492 = vmatprep.subr.bf16.mxu0 0
    %493 = vmatpush1.bf16.msra.mxu0 0
    %494 = vmatprep.subr.bf16.mxu0 0
    %495 = vmatpush1.bf16.msra.mxu0 0
    %496 = vmatprep.subr.bf16.mxu0 0
    %497 = vmatpush1.bf16.msra.mxu0 0
    %498 = vmatprep.subr.bf16.mxu0 0
    %499 = vmatpush1.bf16.msra.mxu0 0
    %500 = vmatprep.subr.bf16.mxu0 0
    %501 = vmatpush1.bf16.msra.mxu0 0
    %502 = vmatprep.subr.bf16.mxu0 0
    %503 = vmatpush1.bf16.msra.mxu0 0
    %504 = vmatprep.subr.bf16.mxu0 0
    %505 = vmatpush1.bf16.msra.mxu0 0
    %506 = vmatprep.subr.bf16.mxu0 0
    %507 = vmatpush1.bf16.msra.mxu0 0
    %508 = vmatprep.subr.bf16.mxu0 0
    %509 = vmatpush1.bf16.msra.mxu0 0
    %510 = vmatprep.subr.bf16.mxu0 0
    %511 = vmatpush1.bf16.msra.mxu0 0
    %512 = vmatprep.mubr.bf16.mxu0 0
    %513 = vmatmul.mubr.bf16.gmra.mrb[0].mxu0 %v478
    %v514 = vpop.f32.mrb[0].mxu0
    %v515 = vadd.f32 0.0, %v514
    %v516 = vpop.f32.mrb[0].mxu0
    %v517 = vpop.f32.mrb[0].mxu0
    %v518 = vpop.f32.mrb[0].mxu0
    %519 = vdwg.mxu0
    %v520 = vadd.f32 %v152, %v515
    %v521 = vtanh.pop %v520
    %v522 = vxor.u32 %v520, 2147483648
    %v523 = vmul.f32 %v522, 1.442695
    %v524 = vpow.pop %v523
    %v525 = vadd.f32 %v524, 1.0
    %v526 = vrcp.pop %v525
    %v527 = vmul.f32 1.0, %v526
    %v528 = vsel %vm48, %v521, %v527
    %v529 = vmul.f32 %v528, %v466
    %531 = vrot.lane.b32.xlu0 %v528, 64
    %v532 = vpop.permute.xlu0 %531
    %v534 = vmul.f32 %v528, %v532
    %536 = vrot.lane.b32.xlu0 %v534, 32
    %v537 = vpop.permute.xlu0 %536
    %v539 = vadd.f32 %v529, %v537
    %v540 = vtanh.pop %v539
    %542 = vrot.lane.b32.xlu0 %v540, 64
    %v543 = vpop.permute.xlu0 %542
    %v545 = vmul.f32 %v528, %v543
    %v546 = vpack.c.bf16 %v545, %v545
    %548 = vrot.lane.b32.xlu0 %v546, 32
    %v549 = vpop.permute.xlu0 %548
    %v551 = vsel %vm88, %v549, 0
    %553 = vmatprep.subr.bf16.mxu0 0
    %554 = vmatpush1.bf16.msra.mxu0 %v177
    %555 = vmatprep.subr.bf16.mxu0 0
    %556 = vmatpush1.bf16.msra.mxu0 %v178
    %557 = vmatprep.subr.bf16.mxu0 0
    %558 = vmatpush1.bf16.msra.mxu0 0
    %559 = vmatprep.subr.bf16.mxu0 0
    %560 = vmatpush1.bf16.msra.mxu0 0
    %561 = vmatprep.subr.bf16.mxu0 0
    %562 = vmatpush1.bf16.msra.mxu0 0
    %563 = vmatprep.subr.bf16.mxu0 0
    %564 = vmatpush1.bf16.msra.mxu0 0
    %565 = vmatprep.subr.bf16.mxu0 0
    %566 = vmatpush1.bf16.msra.mxu0 0
    %567 = vmatprep.subr.bf16.mxu0 0
    %568 = vmatpush1.bf16.msra.mxu0 0
    %569 = vmatprep.subr.bf16.mxu0 0
    %570 = vmatpush1.bf16.msra.mxu0 0
    %571 = vmatprep.subr.bf16.mxu0 0
    %572 = vmatpush1.bf16.msra.mxu0 0
    %573 = vmatprep.subr.bf16.mxu0 0
    %574 = vmatpush1.bf16.msra.mxu0 0
    %575 = vmatprep.subr.bf16.mxu0 0
    %576 = vmatpush1.bf16.msra.mxu0 0
    %577 = vmatprep.subr.bf16.mxu0 0
    %578 = vmatpush1.bf16.msra.mxu0 0
    %579 = vmatprep.subr.bf16.mxu0 0
    %580 = vmatpush1.bf16.msra.mxu0 0
    %581 = vmatprep.subr.bf16.mxu0 0
    %582 = vmatpush1.bf16.msra.mxu0 0
    %583 = vmatprep.subr.bf16.mxu0 0
    %584 = vmatpush1.bf16.msra.mxu0 0
    %585 = vmatprep.mubr.bf16.mxu0 0
    %586 = vmatmul.mubr.bf16.gmra.mrb[0].mxu0 %v551
    %v587 = vpop.f32.mrb[0].mxu0
    %v588 = vadd.f32 0.0, %v587
    %v589 = vpop.f32.mrb[0].mxu0
    %v590 = vpop.f32.mrb[0].mxu0
    %v591 = vpop.f32.mrb[0].mxu0
    %592 = vdwg.mxu0
    %v593 = vadd.f32 %v155, %v588
    %v594 = vtanh.pop %v593
    %v595 = vxor.u32 %v593, 2147483648
    %v596 = vmul.f32 %v595, 1.442695
    %v597 = vpow.pop %v596
    %v598 = vadd.f32 %v597, 1.0
    %v599 = vrcp.pop %v598
    %v600 = vmul.f32 1.0, %v599
    %v601 = vsel %vm48, %v594, %v600
    %v602 = vmul.f32 %v601, %v539
    %604 = vrot.lane.b32.xlu0 %v601, 64
    %v605 = vpop.permute.xlu0 %604
    %v607 = vmul.f32 %v601, %v605
    %609 = vrot.lane.b32.xlu0 %v607, 32
    %v610 = vpop.permute.xlu0 %609
    %v612 = vadd.f32 %v602, %v610
    %v613 = vtanh.pop %v612
    %615 = vrot.lane.b32.xlu0 %v613, 64
    %v616 = vpop.permute.xlu0 %615
    %v618 = vmul.f32 %v601, %v616
    %v619 = vpack.c.bf16 %v618, %v618
    %621 = vrot.lane.b32.xlu0 %v619, 32
    %v622 = vpop.permute.xlu0 %621
    %v624 = vsel %vm88, %v622, 0
    %626 = vmatprep.subr.bf16.mxu0 0
    %627 = vmatpush1.bf16.msra.mxu0 %v177
    %628 = vmatprep.subr.bf16.mxu0 0
    %629 = vmatpush1.bf16.msra.mxu0 %v178
    %630 = vmatprep.subr.bf16.mxu0 0
    %631 = vmatpush1.bf16.msra.mxu0 0
    %632 = vmatprep.subr.bf16.mxu0 0
    %633 = vmatpush1.bf16.msra.mxu0 0
    %634 = vmatprep.subr.bf16.mxu0 0
    %635 = vmatpush1.bf16.msra.mxu0 0
    %636 = vmatprep.subr.bf16.mxu0 0
    %637 = vmatpush1.bf16.msra.mxu0 0
    %638 = vmatprep.subr.bf16.mxu0 0
    %639 = vmatpush1.bf16.msra.mxu0 0
    %640 = vmatprep.subr.bf16.mxu0 0
    %641 = vmatpush1.bf16.msra.mxu0 0
    %642 = vmatprep.subr.bf16.mxu0 0
    %643 = vmatpush1.bf16.msra.mxu0 0
    %644 = vmatprep.subr.bf16.mxu0 0
    %645 = vmatpush1.bf16.msra.mxu0 0
    %646 = vmatprep.subr.bf16.mxu0 0
    %647 = vmatpush1.bf16.msra.mxu0 0
    %648 = vmatprep.subr.bf16.mxu0 0
    %649 = vmatpush1.bf16.msra.mxu0 0
    %650 = vmatprep.subr.bf16.mxu0 0
    %651 = vmatpush1.bf16.msra.mxu0 0
    %652 = vmatprep.subr.bf16.mxu0 0
    %653 = vmatpush1.bf16.msra.mxu0 0
    %654 = vmatprep.subr.bf16.mxu0 0
    %655 = vmatpush1.bf16.msra.mxu0 0
    %656 = vmatprep.subr.bf16.mxu0 0
    %657 = vmatpush1.bf16.msra.mxu0 0
    %658 = vmatprep.mubr.bf16.mxu0 0
    %659 = vmatmul.mubr.bf16.gmra.mrb[0].mxu0 %v624
    %v660 = vpop.f32.mrb[0].mxu0
    %v661 = vadd.f32 0.0, %v660
    %v662 = vpop.f32.mrb[0].mxu0
    %v663 = vpop.f32.mrb[0].mxu0
    %v664 = vpop.f32.mrb[0].mxu0
    %665 = vdwg.mxu0
    %v666 = vadd.f32 %v160, %v661
    %v667 = vtanh.pop %v666
    %v668 = vxor.u32 %v666, 2147483648
    %v669 = vmul.f32 %v668, 1.442695
    %v670 = vpow.pop %v669
    %v671 = vadd.f32 %v670, 1.0
    %v672 = vrcp.pop %v671
    %v673 = vmul.f32 1.0, %v672
    %v674 = vsel %vm48, %v667, %v673
    %v675 = vmul.f32 %v674, %v612
    %677 = vrot.lane.b32.xlu0 %v674, 64
    %v678 = vpop.permute.xlu0 %677
    %v680 = vmul.f32 %v674, %v678
    %682 = vrot.lane.b32.xlu0 %v680, 32
    %v683 = vpop.permute.xlu0 %682
    %v685 = vadd.f32 %v675, %v683
    %v686 = vtanh.pop %v685
    %688 = vrot.lane.b32.xlu0 %v686, 64
    %v689 = vpop.permute.xlu0 %688
    %v691 = vmul.f32 %v674, %v689
    %v692 = vpack.c.bf16 %v691, %v691
    %694 = vrot.lane.b32.xlu0 %v692, 32
    %v695 = vpop.permute.xlu0 %694
    %v697 = vsel %vm88, %v695, 0
    %699 = vmatprep.subr.bf16.mxu0 0
    %700 = vmatpush1.bf16.msra.mxu0 %v177
    %701 = vmatprep.subr.bf16.mxu0 0
    %702 = vmatpush1.bf16.msra.mxu0 %v178
    %703 = vmatprep.subr.bf16.mxu0 0
    %704 = vmatpush1.bf16.msra.mxu0 0
    %705 = vmatprep.subr.bf16.mxu0 0
    %706 = vmatpush1.bf16.msra.mxu0 0
    %707 = vmatprep.subr.bf16.mxu0 0
    %708 = vmatpush1.bf16.msra.mxu0 0
    %709 = vmatprep.subr.bf16.mxu0 0
    %710 = vmatpush1.bf16.msra.mxu0 0
    %711 = vmatprep.subr.bf16.mxu0 0
    %712 = vmatpush1.bf16.msra.mxu0 0
    %713 = vmatprep.subr.bf16.mxu0 0
    %714 = vmatpush1.bf16.msra.mxu0 0
    %715 = vmatprep.subr.bf16.mxu0 0
    %716 = vmatpush1.bf16.msra.mxu0 0
    %717 = vmatprep.subr.bf16.mxu0 0
    %718 = vmatpush1.bf16.msra.mxu0 0
    %719 = vmatprep.subr.bf16.mxu0 0
    %720 = vmatpush1.bf16.msra.mxu0 0
    %721 = vmatprep.subr.bf16.mxu0 0
    %722 = vmatpush1.bf16.msra.mxu0 0
    %723 = vmatprep.subr.bf16.mxu0 0
    %724 = vmatpush1.bf16.msra.mxu0 0
    %725 = vmatprep.subr.bf16.mxu0 0
    %726 = vmatpush1.bf16.msra.mxu0 0
    %727 = vmatprep.subr.bf16.mxu0 0
    %728 = vmatpush1.bf16.msra.mxu0 0
    %729 = vmatprep.subr.bf16.mxu0 0
    %730 = vmatpush1.bf16.msra.mxu0 0
    %731 = vmatprep.mubr.bf16.mxu0 0
    %732 = vmatmul.mubr.bf16.gmra.mrb[0].mxu0 %v697
    %v733 = vpop.f32.mrb[0].mxu0
    %v734 = vadd.f32 0.0, %v733
    %v735 = vpop.f32.mrb[0].mxu0
    %v736 = vpop.f32.mrb[0].mxu0
    %v737 = vpop.f32.mrb[0].mxu0
    %738 = vdwg.mxu0
    %v739 = vadd.f32 %v163, %v734
    %v740 = vtanh.pop %v739
    %v741 = vxor.u32 %v739, 2147483648
    %v742 = vmul.f32 %v741, 1.442695
    %v743 = vpow.pop %v742
    %v744 = vadd.f32 %v743, 1.0
    %v745 = vrcp.pop %v744
    %v746 = vmul.f32 1.0, %v745
    %v747 = vsel %vm48, %v740, %v746
    %v748 = vmul.f32 %v747, %v685
    %750 = vrot.lane.b32.xlu0 %v747, 64
    %v751 = vpop.permute.xlu0 %750
    %v753 = vmul.f32 %v747, %v751
    %755 = vrot.lane.b32.xlu0 %v753, 32
    %v756 = vpop.permute.xlu0 %755
    %v758 = vadd.f32 %v748, %v756
    %v759 = vtanh.pop %v758
    %761 = vrot.lane.b32.xlu0 %v759, 64
    %v762 = vpop.permute.xlu0 %761
    %v764 = vmul.f32 %v747, %v762
    %766 = vrot.lane.b32.xlu0 %v764, 32
    %v767 = vpop.permute.xlu0 %766
    %769 = vst.msk [vmem:[#allocation4] sm:$0xff] %vm88, %v767
    %771 = vrot.lane.b32.xlu0 %v758, 96
    %v772 = vpop.permute.xlu0 %771
    %774 = vst.msk [vmem:[#allocation6] sm:$0xff] %vm88, %v772
    %v775 = vld [vmem:[%s4] sm:$0xf]
    %v776 = vld [vmem:[%s4 + $0x4] sm:$0xf]
    %v777 = vld [vmem:[%s4 + $0x8] sm:$0xf]
    %v778 = vld [vmem:[%s4 + $0xc] sm:$0xf]
    %v779 = vld [vmem:[%s5] sm:$0xf]
    %v780 = vld [vmem:[%s5 + $0x4] sm:$0xf]
    %v781 = vld [vmem:[%s5 + $0x8] sm:$0xf]
    %v782 = vld [vmem:[%s5 + $0xc] sm:$0xf]
    %v783 = vld [vmem:[%s6] sm:$0x1]
    %s784 = scalar_lea.vmem %s9, 8
    %v785 = vld [vmem:[%s784] sm:$0xff]
    %s786 = scalar_lea.vmem %s10, 8
    %v787 = vld [vmem:[%s786] sm:$0xff]
    %v789 = vlaneseq
    %v790 = vshrl.u32 %v789, 7
    %v791 = vsub.s32 0, %v790
    %v792 = vrot.slane %v783, %v791
    %v798 = vunpack.c.l.b16 %v775
    %v799 = vunpack.c.l.b16 %v776
    %v800 = vunpack.c.l.b16 %v777
    %v801 = vunpack.c.l.b16 %v778
    %v802 = vpack.c.b16 %v799, %v798
    %v803 = vpack.c.b16 %v801, %v800
    %806 = vmatprep.subr.bf16.mxu0 0
    %807 = vmatpush1.bf16.msra.mxu0 %v802
    %808 = vmatprep.subr.bf16.mxu0 0
    %809 = vmatpush1.bf16.msra.mxu0 %v803
    %810 = vmatprep.subr.bf16.mxu0 0
    %811 = vmatpush1.bf16.msra.mxu0 0
    %812 = vmatprep.subr.bf16.mxu0 0
    %813 = vmatpush1.bf16.msra.mxu0 0
    %814 = vmatprep.subr.bf16.mxu0 0
    %815 = vmatpush1.bf16.msra.mxu0 0
    %816 = vmatprep.subr.bf16.mxu0 0
    %817 = vmatpush1.bf16.msra.mxu0 0
    %818 = vmatprep.subr.bf16.mxu0 0
    %819 = vmatpush1.bf16.msra.mxu0 0
    %820 = vmatprep.subr.bf16.mxu0 0
    %821 = vmatpush1.bf16.msra.mxu0 0
    %822 = vmatprep.subr.bf16.mxu0 0
    %823 = vmatpush1.bf16.msra.mxu0 0
    %824 = vmatprep.subr.bf16.mxu0 0
    %825 = vmatpush1.bf16.msra.mxu0 0
    %826 = vmatprep.subr.bf16.mxu0 0
    %827 = vmatpush1.bf16.msra.mxu0 0
    %828 = vmatprep.subr.bf16.mxu0 0
    %829 = vmatpush1.bf16.msra.mxu0 0
    %830 = vmatprep.subr.bf16.mxu0 0
    %831 = vmatpush1.bf16.msra.mxu0 0
    %832 = vmatprep.subr.bf16.mxu0 0
    %833 = vmatpush1.bf16.msra.mxu0 0
    %834 = vmatprep.subr.bf16.mxu0 0
    %835 = vmatpush1.bf16.msra.mxu0 0
    %836 = vmatprep.subr.bf16.mxu0 0
    %837 = vmatpush1.bf16.msra.mxu0 0
    %838 = vmatprep.mubr.bf16.mxu0 0
    %839 = vmatmul.mubr.bf16.gmra.mrb[0].mxu0 %v259
    %v840 = vpop.f32.mrb[0].mxu0
    %v841 = vadd.f32 %v792, %v840
    %v842 = vpop.f32.mrb[0].mxu0
    %v843 = vpop.f32.mrb[0].mxu0
    %v844 = vpop.f32.mrb[0].mxu0
    %845 = vdwg.mxu0
    %v846 = vpack.c.bf16 %v785, %v785
    %v851 = vunpack.c.l.b16 %v779
    %v852 = vunpack.c.l.b16 %v780
    %v853 = vunpack.c.l.b16 %v781
    %v854 = vunpack.c.l.b16 %v782
    %v855 = vpack.c.b16 %v852, %v851
    %v856 = vpack.c.b16 %v854, %v853
    %v860 = vsel %vm88, %v846, 0
    %862 = vmatprep.subr.bf16.mxu0 0
    %863 = vmatpush1.bf16.msra.mxu0 %v855
    %864 = vmatprep.subr.bf16.mxu0 0
    %865 = vmatpush1.bf16.msra.mxu0 %v856
    %866 = vmatprep.subr.bf16.mxu0 0
    %867 = vmatpush1.bf16.msra.mxu0 0
    %868 = vmatprep.subr.bf16.mxu0 0
    %869 = vmatpush1.bf16.msra.mxu0 0
    %870 = vmatprep.subr.bf16.mxu0 0
    %871 = vmatpush1.bf16.msra.mxu0 0
    %872 = vmatprep.subr.bf16.mxu0 0
    %873 = vmatpush1.bf16.msra.mxu0 0
    %874 = vmatprep.subr.bf16.mxu0 0
    %875 = vmatpush1.bf16.msra.mxu0 0
    %876 = vmatprep.subr.bf16.mxu0 0
    %877 = vmatpush1.bf16.msra.mxu0 0
    %878 = vmatprep.subr.bf16.mxu0 0
    %879 = vmatpush1.bf16.msra.mxu0 0
    %880 = vmatprep.subr.bf16.mxu0 0
    %881 = vmatpush1.bf16.msra.mxu0 0
    %882 = vmatprep.subr.bf16.mxu0 0
    %883 = vmatpush1.bf16.msra.mxu0 0
    %884 = vmatprep.subr.bf16.mxu0 0
    %885 = vmatpush1.bf16.msra.mxu0 0
    %886 = vmatprep.subr.bf16.mxu0 0
    %887 = vmatpush1.bf16.msra.mxu0 0
    %888 = vmatprep.subr.bf16.mxu0 0
    %889 = vmatpush1.bf16.msra.mxu0 0
    %890 = vmatprep.subr.bf16.mxu0 0
    %891 = vmatpush1.bf16.msra.mxu0 0
    %892 = vmatprep.subr.bf16.mxu0 0
    %893 = vmatpush1.bf16.msra.mxu0 0
    %894 = vmatprep.mubr.bf16.mxu0 0
    %895 = vmatmul.mubr.bf16.gmra.mrb[0].mxu0 %v860
    %v896 = vpop.f32.mrb[0].mxu0
    %v897 = vadd.f32 0.0, %v896
    %v898 = vpop.f32.mrb[0].mxu0
    %v899 = vpop.f32.mrb[0].mxu0
    %v900 = vpop.f32.mrb[0].mxu0
    %901 = vdwg.mxu0
    %v902 = vadd.f32 %v841, %v897
    %v903 = vtanh.pop %v902
    %v904 = vxor.u32 %v902, 2147483648
    %v905 = vmul.f32 %v904, 1.442695
    %v906 = vpow.pop %v905
    %v907 = vadd.f32 %v906, 1.0
    %v908 = vrcp.pop %v907
    %v909 = vmul.f32 1.0, %v908
    %v910 = vsel %vm48, %v903, %v909
    %912 = vrot.lane.b32.xlu0 %v787, 32
    %v913 = vpop.permute.xlu0 %912
    %v915 = vmul.f32 %v910, %v913
    %917 = vrot.lane.b32.xlu0 %v910, 64
    %v918 = vpop.permute.xlu0 %917
    %v920 = vmul.f32 %v910, %v918
    %922 = vrot.lane.b32.xlu0 %v920, 32
    %v923 = vpop.permute.xlu0 %922
    %v925 = vadd.f32 %v915, %v923
    %v926 = vtanh.pop %v925
    %928 = vrot.lane.b32.xlu0 %v926, 64
    %v929 = vpop.permute.xlu0 %928
    %v931 = vmul.f32 %v910, %v929
    %932 = vmatprep.subr.bf16.mxu0 0
    %933 = vmatpush1.bf16.msra.mxu0 %v802
    %934 = vmatprep.subr.bf16.mxu0 0
    %935 = vmatpush1.bf16.msra.mxu0 %v803
    %936 = vmatprep.subr.bf16.mxu0 0
    %937 = vmatpush1.bf16.msra.mxu0 0
    %938 = vmatprep.subr.bf16.mxu0 0
    %939 = vmatpush1.bf16.msra.mxu0 0
    %940 = vmatprep.subr.bf16.mxu0 0
    %941 = vmatpush1.bf16.msra.mxu0 0
    %942 = vmatprep.subr.bf16.mxu0 0
    %943 = vmatpush1.bf16.msra.mxu0 0
    %944 = vmatprep.subr.bf16.mxu0 0
    %945 = vmatpush1.bf16.msra.mxu0 0
    %946 = vmatprep.subr.bf16.mxu0 0
    %947 = vmatpush1.bf16.msra.mxu0 0
    %948 = vmatprep.subr.bf16.mxu0 0
    %949 = vmatpush1.bf16.msra.mxu0 0
    %950 = vmatprep.subr.bf16.mxu0 0
    %951 = vmatpush1.bf16.msra.mxu0 0
    %952 = vmatprep.subr.bf16.mxu0 0
    %953 = vmatpush1.bf16.msra.mxu0 0
    %954 = vmatprep.subr.bf16.mxu0 0
    %955 = vmatpush1.bf16.msra.mxu0 0
    %956 = vmatprep.subr.bf16.mxu0 0
    %957 = vmatpush1.bf16.msra.mxu0 0
    %958 = vmatprep.subr.bf16.mxu0 0
    %959 = vmatpush1.bf16.msra.mxu0 0
    %960 = vmatprep.subr.bf16.mxu0 0
    %961 = vmatpush1.bf16.msra.mxu0 0
    %962 = vmatprep.subr.bf16.mxu0 0
    %963 = vmatpush1.bf16.msra.mxu0 0
    %964 = vmatprep.mubr.bf16.mxu0 0
    %965 = vmatmul.mubr.bf16.gmra.mrb[0].mxu0 %v332
    %v966 = vpop.f32.mrb[0].mxu0
    %v967 = vadd.f32 %v792, %v966
    %v968 = vpop.f32.mrb[0].mxu0
    %v969 = vpop.f32.mrb[0].mxu0
    %v970 = vpop.f32.mrb[0].mxu0
    %971 = vdwg.mxu0
    %v972 = vpack.c.bf16 %v931, %v931
    %974 = vrot.lane.b32.xlu0 %v972, 32
    %v975 = vpop.permute.xlu0 %974
    %v977 = vsel %vm88, %v975, 0
    %979 = vmatprep.subr.bf16.mxu0 0
    %980 = vmatpush1.bf16.msra.mxu0 %v855
    %981 = vmatprep.subr.bf16.mxu0 0
    %982 = vmatpush1.bf16.msra.mxu0 %v856
    %983 = vmatprep.subr.bf16.mxu0 0
    %984 = vmatpush1.bf16.msra.mxu0 0
    %985 = vmatprep.subr.bf16.mxu0 0
    %986 = vmatpush1.bf16.msra.mxu0 0
    %987 = vmatprep.subr.bf16.mxu0 0
    %988 = vmatpush1.bf16.msra.mxu0 0
    %989 = vmatprep.subr.bf16.mxu0 0
    %990 = vmatpush1.bf16.msra.mxu0 0
    %991 = vmatprep.subr.bf16.mxu0 0
    %992 = vmatpush1.bf16.msra.mxu0 0
    %993 = vmatprep.subr.bf16.mxu0 0
    %994 = vmatpush1.bf16.msra.mxu0 0
    %995 = vmatprep.subr.bf16.mxu0 0
    %996 = vmatpush1.bf16.msra.mxu0 0
    %997 = vmatprep.subr.bf16.mxu0 0
    %998 = vmatpush1.bf16.msra.mxu0 0
    %999 = vmatprep.subr.bf16.mxu0 0
    %1000 = vmatpush1.bf16.msra.mxu0 0
    %1001 = vmatprep.subr.bf16.mxu0 0
    %1002 = vmatpush1.bf16.msra.mxu0 0
    %1003 = vmatprep.subr.bf16.mxu0 0
    %1004 = vmatpush1.bf16.msra.mxu0 0
    %1005 = vmatprep.subr.bf16.mxu0 0
    %1006 = vmatpush1.bf16.msra.mxu0 0
    %1007 = vmatprep.subr.bf16.mxu0 0
    %1008 = vmatpush1.bf16.msra.mxu0 0
    %1009 = vmatprep.subr.bf16.mxu0 0
    %1010 = vmatpush1.bf16.msra.mxu0 0
    %1011 = vmatprep.mubr.bf16.mxu0 0
    %1012 = vmatmul.mubr.bf16.gmra.mrb[0].mxu0 %v977
    %v1013 = vpop.f32.mrb[0].mxu0
    %v1014 = vadd.f32 0.0, %v1013
    %v1015 = vpop.f32.mrb[0].mxu0
    %v1016 = vpop.f32.mrb[0].mxu0
    %v1017 = vpop.f32.mrb[0].mxu0
    %1018 = vdwg.mxu0
    %v1019 = vadd.f32 %v967, %v1014
    %v1020 = vtanh.pop %v1019
    %v1021 = vxor.u32 %v1019, 2147483648
    %v1022 = vmul.f32 %v1021, 1.442695
    %v1023 = vpow.pop %v1022
    %v1024 = vadd.f32 %v1023, 1.0
    %v1025 = vrcp.pop %v1024
    %v1026 = vmul.f32 1.0, %v1025
    %v1027 = vsel %vm48, %v1020, %v1026
    %v1028 = vmul.f32 %v1027, %v925
    %1030 = vrot.lane.b32.xlu0 %v1027, 64
    %v1031 = vpop.permute.xlu0 %1030
    %v1033 = vmul.f32 %v1027, %v1031
    %1035 = vrot.lane.b32.xlu0 %v1033, 32
    %v1036 = vpop.permute.xlu0 %1035
    %v1038 = vadd.f32 %v1028, %v1036
    %v1039 = vtanh.pop %v1038
    %1041 = vrot.lane.b32.xlu0 %v1039, 64
    %v1042 = vpop.permute.xlu0 %1041
    %v1044 = vmul.f32 %v1027, %v1042
    %1045 = vmatprep.subr.bf16.mxu0 0
    %1046 = vmatpush1.bf16.msra.mxu0 %v802
    %1047 = vmatprep.subr.bf16.mxu0 0
    %1048 = vmatpush1.bf16.msra.mxu0 %v803
    %1049 = vmatprep.subr.bf16.mxu0 0
    %1050 = vmatpush1.bf16.msra.mxu0 0
    %1051 = vmatprep.subr.bf16.mxu0 0
    %1052 = vmatpush1.bf16.msra.mxu0 0
    %1053 = vmatprep.subr.bf16.mxu0 0
    %1054 = vmatpush1.bf16.msra.mxu0 0
    %1055 = vmatprep.subr.bf16.mxu0 0
    %1056 = vmatpush1.bf16.msra.mxu0 0
    %1057 = vmatprep.subr.bf16.mxu0 0
    %1058 = vmatpush1.bf16.msra.mxu0 0
    %1059 = vmatprep.subr.bf16.mxu0 0
    %1060 = vmatpush1.bf16.msra.mxu0 0
    %1061 = vmatprep.subr.bf16.mxu0 0
    %1062 = vmatpush1.bf16.msra.mxu0 0
    %1063 = vmatprep.subr.bf16.mxu0 0
    %1064 = vmatpush1.bf16.msra.mxu0 0
    %1065 = vmatprep.subr.bf16.mxu0 0
    %1066 = vmatpush1.bf16.msra.mxu0 0
    %1067 = vmatprep.subr.bf16.mxu0 0
    %1068 = vmatpush1.bf16.msra.mxu0 0
    %1069 = vmatprep.subr.bf16.mxu0 0
    %1070 = vmatpush1.bf16.msra.mxu0 0
    %1071 = vmatprep.subr.bf16.mxu0 0
    %1072 = vmatpush1.bf16.msra.mxu0 0
    %1073 = vmatprep.subr.bf16.mxu0 0
    %1074 = vmatpush1.bf16.msra.mxu0 0
    %1075 = vmatprep.subr.bf16.mxu0 0
    %1076 = vmatpush1.bf16.msra.mxu0 0
    %1077 = vmatprep.mubr.bf16.mxu0 0
    %1078 = vmatmul.mubr.bf16.gmra.mrb[0].mxu0 %v405
    %v1079 = vpop.f32.mrb[0].mxu0
    %v1080 = vadd.f32 %v792, %v1079
    %v1081 = vpop.f32.mrb[0].mxu0
    %v1082 = vpop.f32.mrb[0].mxu0
    %v1083 = vpop.f32.mrb[0].mxu0
    %1084 = vdwg.mxu0
    %v1085 = vpack.c.bf16 %v1044, %v1044
    %1087 = vrot.lane.b32.xlu0 %v1085, 32
    %v1088 = vpop.permute.xlu0 %1087
    %v1090 = vsel %vm88, %v1088, 0
    %1092 = vmatprep.subr.bf16.mxu0 0
    %1093 = vmatpush1.bf16.msra.mxu0 %v855
    %1094 = vmatprep.subr.bf16.mxu0 0
    %1095 = vmatpush1.bf16.msra.mxu0 %v856
    %1096 = vmatprep.subr.bf16.mxu0 0
    %1097 = vmatpush1.bf16.msra.mxu0 0
    %1098 = vmatprep.subr.bf16.mxu0 0
    %1099 = vmatpush1.bf16.msra.mxu0 0
    %1100 = vmatprep.subr.bf16.mxu0 0
    %1101 = vmatpush1.bf16.msra.mxu0 0
    %1102 = vmatprep.subr.bf16.mxu0 0
    %1103 = vmatpush1.bf16.msra.mxu0 0
    %1104 = vmatprep.subr.bf16.mxu0 0
    %1105 = vmatpush1.bf16.msra.mxu0 0
    %1106 = vmatprep.subr.bf16.mxu0 0
    %1107 = vmatpush1.bf16.msra.mxu0 0
    %1108 = vmatprep.subr.bf16.mxu0 0
    %1109 = vmatpush1.bf16.msra.mxu0 0
    %1110 = vmatprep.subr.bf16.mxu0 0
    %1111 = vmatpush1.bf16.msra.mxu0 0
    %1112 = vmatprep.subr.bf16.mxu0 0
    %1113 = vmatpush1.bf16.msra.mxu0 0
    %1114 = vmatprep.subr.bf16.mxu0 0
    %1115 = vmatpush1.bf16.msra.mxu0 0
    %1116 = vmatprep.subr.bf16.mxu0 0
    %1117 = vmatpush1.bf16.msra.mxu0 0
    %1118 = vmatprep.subr.bf16.mxu0 0
    %1119 = vmatpush1.bf16.msra.mxu0 0
    %1120 = vmatprep.subr.bf16.mxu0 0
    %1121 = vmatpush1.bf16.msra.mxu0 0
    %1122 = vmatprep.subr.bf16.mxu0 0
    %1123 = vmatpush1.bf16.msra.mxu0 0
    %1124 = vmatprep.mubr.bf16.mxu0 0
    %1125 = vmatmul.mubr.bf16.gmra.mrb[0].mxu0 %v1090
    %v1126 = vpop.f32.mrb[0].mxu0
    %v1127 = vadd.f32 0.0, %v1126
    %v1128 = vpop.f32.mrb[0].mxu0
    %v1129 = vpop.f32.mrb[0].mxu0
    %v1130 = vpop.f32.mrb[0].mxu0
    %1131 = vdwg.mxu0
    %v1132 = vadd.f32 %v1080, %v1127
    %v1133 = vtanh.pop %v1132
    %v1134 = vxor.u32 %v1132, 2147483648
    %v1135 = vmul.f32 %v1134, 1.442695
    %v1136 = vpow.pop %v1135
    %v1137 = vadd.f32 %v1136, 1.0
    %v1138 = vrcp.pop %v1137
    %v1139 = vmul.f32 1.0, %v1138
    %v1140 = vsel %vm48, %v1133, %v1139
    %v1141 = vmul.f32 %v1140, %v1038
    %1143 = vrot.lane.b32.xlu0 %v1140, 64
    %v1144 = vpop.permute.xlu0 %1143
    %v1146 = vmul.f32 %v1140, %v1144
    %1148 = vrot.lane.b32.xlu0 %v1146, 32
    %v1149 = vpop.permute.xlu0 %1148
    %v1151 = vadd.f32 %v1141, %v1149
    %v1152 = vtanh.pop %v1151
    %1154 = vrot.lane.b32.xlu0 %v1152, 64
    %v1155 = vpop.permute.xlu0 %1154
    %v1157 = vmul.f32 %v1140, %v1155
    %1158 = vmatprep.subr.bf16.mxu0 0
    %1159 = vmatpush1.bf16.msra.mxu0 %v802
    %1160 = vmatprep.subr.bf16.mxu0 0
    %1161 = vmatpush1.bf16.msra.mxu0 %v803
    %1162 = vmatprep.subr.bf16.mxu0 0
    %1163 = vmatpush1.bf16.msra.mxu0 0
    %1164 = vmatprep.subr.bf16.mxu0 0
    %1165 = vmatpush1.bf16.msra.mxu0 0
    %1166 = vmatprep.subr.bf16.mxu0 0
    %1167 = vmatpush1.bf16.msra.mxu0 0
    %1168 = vmatprep.subr.bf16.mxu0 0
    %1169 = vmatpush1.bf16.msra.mxu0 0
    %1170 = vmatprep.subr.bf16.mxu0 0
    %1171 = vmatpush1.bf16.msra.mxu0 0
    %1172 = vmatprep.subr.bf16.mxu0 0
    %1173 = vmatpush1.bf16.msra.mxu0 0
    %1174 = vmatprep.subr.bf16.mxu0 0
    %1175 = vmatpush1.bf16.msra.mxu0 0
    %1176 = vmatprep.subr.bf16.mxu0 0
    %1177 = vmatpush1.bf16.msra.mxu0 0
    %1178 = vmatprep.subr.bf16.mxu0 0
    %1179 = vmatpush1.bf16.msra.mxu0 0
    %1180 = vmatprep.subr.bf16.mxu0 0
    %1181 = vmatpush1.bf16.msra.mxu0 0
    %1182 = vmatprep.subr.bf16.mxu0 0
    %1183 = vmatpush1.bf16.msra.mxu0 0
    %1184 = vmatprep.subr.bf16.mxu0 0
    %1185 = vmatpush1.bf16.msra.mxu0 0
    %1186 = vmatprep.subr.bf16.mxu0 0
    %1187 = vmatpush1.bf16.msra.mxu0 0
    %1188 = vmatprep.subr.bf16.mxu0 0
    %1189 = vmatpush1.bf16.msra.mxu0 0
    %1190 = vmatprep.mubr.bf16.mxu0 0
    %1191 = vmatmul.mubr.bf16.gmra.mrb[0].mxu0 %v478
    %v1192 = vpop.f32.mrb[0].mxu0
    %v1193 = vadd.f32 %v792, %v1192
    %v1194 = vpop.f32.mrb[0].mxu0
    %v1195 = vpop.f32.mrb[0].mxu0
    %v1196 = vpop.f32.mrb[0].mxu0
    %1197 = vdwg.mxu0
    %v1198 = vpack.c.bf16 %v1157, %v1157
    %1200 = vrot.lane.b32.xlu0 %v1198, 32
    %v1201 = vpop.permute.xlu0 %1200
    %v1203 = vsel %vm88, %v1201, 0
    %1205 = vmatprep.subr.bf16.mxu0 0
    %1206 = vmatpush1.bf16.msra.mxu0 %v855
    %1207 = vmatprep.subr.bf16.mxu0 0
    %1208 = vmatpush1.bf16.msra.mxu0 %v856
    %1209 = vmatprep.subr.bf16.mxu0 0
    %1210 = vmatpush1.bf16.msra.mxu0 0
    %1211 = vmatprep.subr.bf16.mxu0 0
    %1212 = vmatpush1.bf16.msra.mxu0 0
    %1213 = vmatprep.subr.bf16.mxu0 0
    %1214 = vmatpush1.bf16.msra.mxu0 0
    %1215 = vmatprep.subr.bf16.mxu0 0
    %1216 = vmatpush1.bf16.msra.mxu0 0
    %1217 = vmatprep.subr.bf16.mxu0 0
    %1218 = vmatpush1.bf16.msra.mxu0 0
    %1219 = vmatprep.subr.bf16.mxu0 0
    %1220 = vmatpush1.bf16.msra.mxu0 0
    %1221 = vmatprep.subr.bf16.mxu0 0
    %1222 = vmatpush1.bf16.msra.mxu0 0
    %1223 = vmatprep.subr.bf16.mxu0 0
    %1224 = vmatpush1.bf16.msra.mxu0 0
    %1225 = vmatprep.subr.bf16.mxu0 0
    %1226 = vmatpush1.bf16.msra.mxu0 0
    %1227 = vmatprep.subr.bf16.mxu0 0
    %1228 = vmatpush1.bf16.msra.mxu0 0
    %1229 = vmatprep.subr.bf16.mxu0 0
    %1230 = vmatpush1.bf16.msra.mxu0 0
    %1231 = vmatprep.subr.bf16.mxu0 0
    %1232 = vmatpush1.bf16.msra.mxu0 0
    %1233 = vmatprep.subr.bf16.mxu0 0
    %1234 = vmatpush1.bf16.msra.mxu0 0
    %1235 = vmatprep.subr.bf16.mxu0 0
    %1236 = vmatpush1.bf16.msra.mxu0 0
    %1237 = vmatprep.mubr.bf16.mxu0 0
    %1238 = vmatmul.mubr.bf16.gmra.mrb[0].mxu0 %v1203
    %v1239 = vpop.f32.mrb[0].mxu0
    %v1240 = vadd.f32 0.0, %v1239
    %v1241 = vpop.f32.mrb[0].mxu0
    %v1242 = vpop.f32.mrb[0].mxu0
    %v1243 = vpop.f32.mrb[0].mxu0
    %1244 = vdwg.mxu0
    %v1245 = vadd.f32 %v1193, %v1240
    %v1246 = vtanh.pop %v1245
    %v1247 = vxor.u32 %v1245, 2147483648
    %v1248 = vmul.f32 %v1247, 1.442695
    %v1249 = vpow.pop %v1248
    %v1250 = vadd.f32 %v1249, 1.0
    %v1251 = vrcp.pop %v1250
    %v1252 = vmul.f32 1.0, %v1251
    %v1253 = vsel %vm48, %v1246, %v1252
    %v1254 = vmul.f32 %v1253, %v1151
    %1256 = vrot.lane.b32.xlu0 %v1253, 64
    %v1257 = vpop.permute.xlu0 %1256
    %v1259 = vmul.f32 %v1253, %v1257
    %1261 = vrot.lane.b32.xlu0 %v1259, 32
    %v1262 = vpop.permute.xlu0 %1261
    %v1264 = vadd.f32 %v1254, %v1262
    %v1265 = vtanh.pop %v1264
    %1267 = vrot.lane.b32.xlu0 %v1265, 64
    %v1268 = vpop.permute.xlu0 %1267
    %v1270 = vmul.f32 %v1253, %v1268
    %1271 = vmatprep.subr.bf16.mxu0 0
    %1272 = vmatpush1.bf16.msra.mxu0 %v802
    %1273 = vmatprep.subr.bf16.mxu0 0
    %1274 = vmatpush1.bf16.msra.mxu0 %v803
    %1275 = vmatprep.subr.bf16.mxu0 0
    %1276 = vmatpush1.bf16.msra.mxu0 0
    %1277 = vmatprep.subr.bf16.mxu0 0
    %1278 = vmatpush1.bf16.msra.mxu0 0
    %1279 = vmatprep.subr.bf16.mxu0 0
    %1280 = vmatpush1.bf16.msra.mxu0 0
    %1281 = vmatprep.subr.bf16.mxu0 0
    %1282 = vmatpush1.bf16.msra.mxu0 0
    %1283 = vmatprep.subr.bf16.mxu0 0
    %1284 = vmatpush1.bf16.msra.mxu0 0
    %1285 = vmatprep.subr.bf16.mxu0 0
    %1286 = vmatpush1.bf16.msra.mxu0 0
    %1287 = vmatprep.subr.bf16.mxu0 0
    %1288 = vmatpush1.bf16.msra.mxu0 0
    %1289 = vmatprep.subr.bf16.mxu0 0
    %1290 = vmatpush1.bf16.msra.mxu0 0
    %1291 = vmatprep.subr.bf16.mxu0 0
    %1292 = vmatpush1.bf16.msra.mxu0 0
    %1293 = vmatprep.subr.bf16.mxu0 0
    %1294 = vmatpush1.bf16.msra.mxu0 0
    %1295 = vmatprep.subr.bf16.mxu0 0
    %1296 = vmatpush1.bf16.msra.mxu0 0
    %1297 = vmatprep.subr.bf16.mxu0 0
    %1298 = vmatpush1.bf16.msra.mxu0 0
    %1299 = vmatprep.subr.bf16.mxu0 0
    %1300 = vmatpush1.bf16.msra.mxu0 0
    %1301 = vmatprep.subr.bf16.mxu0 0
    %1302 = vmatpush1.bf16.msra.mxu0 0
    %1303 = vmatprep.mubr.bf16.mxu0 0
    %1304 = vmatmul.mubr.bf16.gmra.mrb[0].mxu0 %v551
    %v1305 = vpop.f32.mrb[0].mxu0
    %v1306 = vadd.f32 %v792, %v1305
    %v1307 = vpop.f32.mrb[0].mxu0
    %v1308 = vpop.f32.mrb[0].mxu0
    %v1309 = vpop.f32.mrb[0].mxu0
    %1310 = vdwg.mxu0
    %v1311 = vpack.c.bf16 %v1270, %v1270
    %1313 = vrot.lane.b32.xlu0 %v1311, 32
    %v1314 = vpop.permute.xlu0 %1313
    %v1316 = vsel %vm88, %v1314, 0
    %1318 = vmatprep.subr.bf16.mxu0 0
    %1319 = vmatpush1.bf16.msra.mxu0 %v855
    %1320 = vmatprep.subr.bf16.mxu0 0
    %1321 = vmatpush1.bf16.msra.mxu0 %v856
    %1322 = vmatprep.subr.bf16.mxu0 0
    %1323 = vmatpush1.bf16.msra.mxu0 0
    %1324 = vmatprep.subr.bf16.mxu0 0
    %1325 = vmatpush1.bf16.msra.mxu0 0
    %1326 = vmatprep.subr.bf16.mxu0 0
    %1327 = vmatpush1.bf16.msra.mxu0 0
    %1328 = vmatprep.subr.bf16.mxu0 0
    %1329 = vmatpush1.bf16.msra.mxu0 0
    %1330 = vmatprep.subr.bf16.mxu0 0
    %1331 = vmatpush1.bf16.msra.mxu0 0
    %1332 = vmatprep.subr.bf16.mxu0 0
    %1333 = vmatpush1.bf16.msra.mxu0 0
    %1334 = vmatprep.subr.bf16.mxu0 0
    %1335 = vmatpush1.bf16.msra.mxu0 0
    %1336 = vmatprep.subr.bf16.mxu0 0
    %1337 = vmatpush1.bf16.msra.mxu0 0
    %1338 = vmatprep.subr.bf16.mxu0 0
    %1339 = vmatpush1.bf16.msra.mxu0 0
    %1340 = vmatprep.subr.bf16.mxu0 0
    %1341 = vmatpush1.bf16.msra.mxu0 0
    %1342 = vmatprep.subr.bf16.mxu0 0
    %1343 = vmatpush1.bf16.msra.mxu0 0
    %1344 = vmatprep.subr.bf16.mxu0 0
    %1345 = vmatpush1.bf16.msra.mxu0 0
    %1346 = vmatprep.subr.bf16.mxu0 0
    %1347 = vmatpush1.bf16.msra.mxu0 0
    %1348 = vmatprep.subr.bf16.mxu0 0
    %1349 = vmatpush1.bf16.msra.mxu0 0
    %1350 = vmatprep.mubr.bf16.mxu0 0
    %1351 = vmatmul.mubr.bf16.gmra.mrb[0].mxu0 %v1316
    %v1352 = vpop.f32.mrb[0].mxu0
    %v1353 = vadd.f32 0.0, %v1352
    %v1354 = vpop.f32.mrb[0].mxu0
    %v1355 = vpop.f32.mrb[0].mxu0
    %v1356 = vpop.f32.mrb[0].mxu0
    %1357 = vdwg.mxu0
    %v1358 = vadd.f32 %v1306, %v1353
    %v1359 = vtanh.pop %v1358
    %v1360 = vxor.u32 %v1358, 2147483648
    %v1361 = vmul.f32 %v1360, 1.442695
    %v1362 = vpow.pop %v1361
    %v1363 = vadd.f32 %v1362, 1.0
    %v1364 = vrcp.pop %v1363
    %v1365 = vmul.f32 1.0, %v1364
    %v1366 = vsel %vm48, %v1359, %v1365
    %v1367 = vmul.f32 %v1366, %v1264
    %1369 = vrot.lane.b32.xlu0 %v1366, 64
    %v1370 = vpop.permute.xlu0 %1369
    %v1372 = vmul.f32 %v1366, %v1370
    %1374 = vrot.lane.b32.xlu0 %v1372, 32
    %v1375 = vpop.permute.xlu0 %1374
    %v1377 = vadd.f32 %v1367, %v1375
    %v1378 = vtanh.pop %v1377
    %1380 = vrot.lane.b32.xlu0 %v1378, 64
    %v1381 = vpop.permute.xlu0 %1380
    %v1383 = vmul.f32 %v1366, %v1381
    %1384 = vmatprep.subr.bf16.mxu0 0
    %1385 = vmatpush1.bf16.msra.mxu0 %v802
    %1386 = vmatprep.subr.bf16.mxu0 0
    %1387 = vmatpush1.bf16.msra.mxu0 %v803
    %1388 = vmatprep.subr.bf16.mxu0 0
    %1389 = vmatpush1.bf16.msra.mxu0 0
    %1390 = vmatprep.subr.bf16.mxu0 0
    %1391 = vmatpush1.bf16.msra.mxu0 0
    %1392 = vmatprep.subr.bf16.mxu0 0
    %1393 = vmatpush1.bf16.msra.mxu0 0
    %1394 = vmatprep.subr.bf16.mxu0 0
    %1395 = vmatpush1.bf16.msra.mxu0 0
    %1396 = vmatprep.subr.bf16.mxu0 0
    %1397 = vmatpush1.bf16.msra.mxu0 0
    %1398 = vmatprep.subr.bf16.mxu0 0
    %1399 = vmatpush1.bf16.msra.mxu0 0
    %1400 = vmatprep.subr.bf16.mxu0 0
    %1401 = vmatpush1.bf16.msra.mxu0 0
    %1402 = vmatprep.subr.bf16.mxu0 0
    %1403 = vmatpush1.bf16.msra.mxu0 0
    %1404 = vmatprep.subr.bf16.mxu0 0
    %1405 = vmatpush1.bf16.msra.mxu0 0
    %1406 = vmatprep.subr.bf16.mxu0 0
    %1407 = vmatpush1.bf16.msra.mxu0 0
    %1408 = vmatprep.subr.bf16.mxu0 0
    %1409 = vmatpush1.bf16.msra.mxu0 0
    %1410 = vmatprep.subr.bf16.mxu0 0
    %1411 = vmatpush1.bf16.msra.mxu0 0
    %1412 = vmatprep.subr.bf16.mxu0 0
    %1413 = vmatpush1.bf16.msra.mxu0 0
    %1414 = vmatprep.subr.bf16.mxu0 0
    %1415 = vmatpush1.bf16.msra.mxu0 0
    %1416 = vmatprep.mubr.bf16.mxu0 0
    %1417 = vmatmul.mubr.bf16.gmra.mrb[0].mxu0 %v624
    %v1418 = vpop.f32.mrb[0].mxu0
    %v1419 = vadd.f32 %v792, %v1418
    %v1420 = vpop.f32.mrb[0].mxu0
    %v1421 = vpop.f32.mrb[0].mxu0
    %v1422 = vpop.f32.mrb[0].mxu0
    %1423 = vdwg.mxu0
    %v1424 = vpack.c.bf16 %v1383, %v1383
    %1426 = vrot.lane.b32.xlu0 %v1424, 32
    %v1427 = vpop.permute.xlu0 %1426
    %v1429 = vsel %vm88, %v1427, 0
    %1431 = vmatprep.subr.bf16.mxu0 0
    %1432 = vmatpush1.bf16.msra.mxu0 %v855
    %1433 = vmatprep.subr.bf16.mxu0 0
    %1434 = vmatpush1.bf16.msra.mxu0 %v856
    %1435 = vmatprep.subr.bf16.mxu0 0
    %1436 = vmatpush1.bf16.msra.mxu0 0
    %1437 = vmatprep.subr.bf16.mxu0 0
    %1438 = vmatpush1.bf16.msra.mxu0 0
    %1439 = vmatprep.subr.bf16.mxu0 0
    %1440 = vmatpush1.bf16.msra.mxu0 0
    %1441 = vmatprep.subr.bf16.mxu0 0
    %1442 = vmatpush1.bf16.msra.mxu0 0
    %1443 = vmatprep.subr.bf16.mxu0 0
    %1444 = vmatpush1.bf16.msra.mxu0 0
    %1445 = vmatprep.subr.bf16.mxu0 0
    %1446 = vmatpush1.bf16.msra.mxu0 0
    %1447 = vmatprep.subr.bf16.mxu0 0
    %1448 = vmatpush1.bf16.msra.mxu0 0
    %1449 = vmatprep.subr.bf16.mxu0 0
    %1450 = vmatpush1.bf16.msra.mxu0 0
    %1451 = vmatprep.subr.bf16.mxu0 0
    %1452 = vmatpush1.bf16.msra.mxu0 0
    %1453 = vmatprep.subr.bf16.mxu0 0
    %1454 = vmatpush1.bf16.msra.mxu0 0
    %1455 = vmatprep.subr.bf16.mxu0 0
    %1456 = vmatpush1.bf16.msra.mxu0 0
    %1457 = vmatprep.subr.bf16.mxu0 0
    %1458 = vmatpush1.bf16.msra.mxu0 0
    %1459 = vmatprep.subr.bf16.mxu0 0
    %1460 = vmatpush1.bf16.msra.mxu0 0
    %1461 = vmatprep.subr.bf16.mxu0 0
    %1462 = vmatpush1.bf16.msra.mxu0 0
    %1463 = vmatprep.mubr.bf16.mxu0 0
    %1464 = vmatmul.mubr.bf16.gmra.mrb[0].mxu0 %v1429
    %v1465 = vpop.f32.mrb[0].mxu0
    %v1466 = vadd.f32 0.0, %v1465
    %v1467 = vpop.f32.mrb[0].mxu0
    %v1468 = vpop.f32.mrb[0].mxu0
    %v1469 = vpop.f32.mrb[0].mxu0
    %1470 = vdwg.mxu0
    %v1471 = vadd.f32 %v1419, %v1466
    %v1472 = vtanh.pop %v1471
    %v1473 = vxor.u32 %v1471, 2147483648
    %v1474 = vmul.f32 %v1473, 1.442695
    %v1475 = vpow.pop %v1474
    %v1476 = vadd.f32 %v1475, 1.0
    %v1477 = vrcp.pop %v1476
    %v1478 = vmul.f32 1.0, %v1477
    %v1479 = vsel %vm48, %v1472, %v1478
    %v1480 = vmul.f32 %v1479, %v1377
    %1482 = vrot.lane.b32.xlu0 %v1479, 64
    %v1483 = vpop.permute.xlu0 %1482
    %v1485 = vmul.f32 %v1479, %v1483
    %1487 = vrot.lane.b32.xlu0 %v1485, 32
    %v1488 = vpop.permute.xlu0 %1487
    %v1490 = vadd.f32 %v1480, %v1488
    %v1491 = vtanh.pop %v1490
    %1493 = vrot.lane.b32.xlu0 %v1491, 64
    %v1494 = vpop.permute.xlu0 %1493
    %v1496 = vmul.f32 %v1479, %v1494
    %1497 = vmatprep.subr.bf16.mxu0 0
    %1498 = vmatpush1.bf16.msra.mxu0 %v802
    %1499 = vmatprep.subr.bf16.mxu0 0
    %1500 = vmatpush1.bf16.msra.mxu0 %v803
    %1501 = vmatprep.subr.bf16.mxu0 0
    %1502 = vmatpush1.bf16.msra.mxu0 0
    %1503 = vmatprep.subr.bf16.mxu0 0
    %1504 = vmatpush1.bf16.msra.mxu0 0
    %1505 = vmatprep.subr.bf16.mxu0 0
    %1506 = vmatpush1.bf16.msra.mxu0 0
    %1507 = vmatprep.subr.bf16.mxu0 0
    %1508 = vmatpush1.bf16.msra.mxu0 0
    %1509 = vmatprep.subr.bf16.mxu0 0
    %1510 = vmatpush1.bf16.msra.mxu0 0
    %1511 = vmatprep.subr.bf16.mxu0 0
    %1512 = vmatpush1.bf16.msra.mxu0 0
    %1513 = vmatprep.subr.bf16.mxu0 0
    %1514 = vmatpush1.bf16.msra.mxu0 0
    %1515 = vmatprep.subr.bf16.mxu0 0
    %1516 = vmatpush1.bf16.msra.mxu0 0
    %1517 = vmatprep.subr.bf16.mxu0 0
    %1518 = vmatpush1.bf16.msra.mxu0 0
    %1519 = vmatprep.subr.bf16.mxu0 0
    %1520 = vmatpush1.bf16.msra.mxu0 0
    %1521 = vmatprep.subr.bf16.mxu0 0
    %1522 = vmatpush1.bf16.msra.mxu0 0
    %1523 = vmatprep.subr.bf16.mxu0 0
    %1524 = vmatpush1.bf16.msra.mxu0 0
    %1525 = vmatprep.subr.bf16.mxu0 0
    %1526 = vmatpush1.bf16.msra.mxu0 0
    %1527 = vmatprep.subr.bf16.mxu0 0
    %1528 = vmatpush1.bf16.msra.mxu0 0
    %1529 = vmatprep.mubr.bf16.mxu0 0
    %1530 = vmatmul.mubr.bf16.gmra.mrb[0].mxu0 %v697
    %v1531 = vpop.f32.mrb[0].mxu0
    %v1532 = vadd.f32 %v792, %v1531
    %v1533 = vpop.f32.mrb[0].mxu0
    %v1534 = vpop.f32.mrb[0].mxu0
    %v1535 = vpop.f32.mrb[0].mxu0
    %1536 = vdwg.mxu0
    %v1537 = vpack.c.bf16 %v1496, %v1496
    %1539 = vrot.lane.b32.xlu0 %v1537, 32
    %v1540 = vpop.permute.xlu0 %1539
    %v1542 = vsel %vm88, %v1540, 0
    %1544 = vmatprep.subr.bf16.mxu0 0
    %1545 = vmatpush1.bf16.msra.mxu0 %v855
    %1546 = vmatprep.subr.bf16.mxu0 0
    %1547 = vmatpush1.bf16.msra.mxu0 %v856
    %1548 = vmatprep.subr.bf16.mxu0 0
    %1549 = vmatpush1.bf16.msra.mxu0 0
    %1550 = vmatprep.subr.bf16.mxu0 0
    %1551 = vmatpush1.bf16.msra.mxu0 0
    %1552 = vmatprep.subr.bf16.mxu0 0
    %1553 = vmatpush1.bf16.msra.mxu0 0
    %1554 = vmatprep.subr.bf16.mxu0 0
    %1555 = vmatpush1.bf16.msra.mxu0 0
    %1556 = vmatprep.subr.bf16.mxu0 0
    %1557 = vmatpush1.bf16.msra.mxu0 0
    %1558 = vmatprep.subr.bf16.mxu0 0
    %1559 = vmatpush1.bf16.msra.mxu0 0
    %1560 = vmatprep.subr.bf16.mxu0 0
    %1561 = vmatpush1.bf16.msra.mxu0 0
    %1562 = vmatprep.subr.bf16.mxu0 0
    %1563 = vmatpush1.bf16.msra.mxu0 0
    %1564 = vmatprep.subr.bf16.mxu0 0
    %1565 = vmatpush1.bf16.msra.mxu0 0
    %1566 = vmatprep.subr.bf16.mxu0 0
    %1567 = vmatpush1.bf16.msra.mxu0 0
    %1568 = vmatprep.subr.bf16.mxu0 0
    %1569 = vmatpush1.bf16.msra.mxu0 0
    %1570 = vmatprep.subr.bf16.mxu0 0
    %1571 = vmatpush1.bf16.msra.mxu0 0
    %1572 = vmatprep.subr.bf16.mxu0 0
    %1573 = vmatpush1.bf16.msra.mxu0 0
    %1574 = vmatprep.subr.bf16.mxu0 0
    %1575 = vmatpush1.bf16.msra.mxu0 0
    %1576 = vmatprep.mubr.bf16.mxu0 0
    %1577 = vmatmul.mubr.bf16.gmra.mrb[0].mxu0 %v1542
    %v1578 = vpop.f32.mrb[0].mxu0
    %v1579 = vadd.f32 0.0, %v1578
    %v1580 = vpop.f32.mrb[0].mxu0
    %v1581 = vpop.f32.mrb[0].mxu0
    %v1582 = vpop.f32.mrb[0].mxu0
    %1583 = vdwg.mxu0
    %v1584 = vadd.f32 %v1532, %v1579
    %v1585 = vtanh.pop %v1584
    %v1586 = vxor.u32 %v1584, 2147483648
    %v1587 = vmul.f32 %v1586, 1.442695
    %v1588 = vpow.pop %v1587
    %v1589 = vadd.f32 %v1588, 1.0
    %v1590 = vrcp.pop %v1589
    %v1591 = vmul.f32 1.0, %v1590
    %v1592 = vsel %vm48, %v1585, %v1591
    %v1593 = vmul.f32 %v1592, %v1490
    %1595 = vrot.lane.b32.xlu0 %v1592, 64
    %v1596 = vpop.permute.xlu0 %1595
    %v1598 = vmul.f32 %v1592, %v1596
    %1600 = vrot.lane.b32.xlu0 %v1598, 32
    %v1601 = vpop.permute.xlu0 %1600
    %v1603 = vadd.f32 %v1593, %v1601
    %v1604 = vtanh.pop %v1603
    %1606 = vrot.lane.b32.xlu0 %v1604, 64
    %v1607 = vpop.permute.xlu0 %1606
    %v1609 = vmul.f32 %v1592, %v1607
    %v1610 = vpack.c.bf16 %v764, %v764
    %1612 = vrot.lane.b32.xlu0 %v1610, 32
    %v1613 = vpop.permute.xlu0 %1612
    %v1615 = vsel %vm88, %v1613, 0
    %1617 = vmatprep.subr.bf16.mxu0 0
    %1618 = vmatpush1.bf16.msra.mxu0 %v802
    %1619 = vmatprep.subr.bf16.mxu0 0
    %1620 = vmatpush1.bf16.msra.mxu0 %v803
    %1621 = vmatprep.subr.bf16.mxu0 0
    %1622 = vmatpush1.bf16.msra.mxu0 0
    %1623 = vmatprep.subr.bf16.mxu0 0
    %1624 = vmatpush1.bf16.msra.mxu0 0
    %1625 = vmatprep.subr.bf16.mxu0 0
    %1626 = vmatpush1.bf16.msra.mxu0 0
    %1627 = vmatprep.subr.bf16.mxu0 0
    %1628 = vmatpush1.bf16.msra.mxu0 0
    %1629 = vmatprep.subr.bf16.mxu0 0
    %1630 = vmatpush1.bf16.msra.mxu0 0
    %1631 = vmatprep.subr.bf16.mxu0 0
    %1632 = vmatpush1.bf16.msra.mxu0 0
    %1633 = vmatprep.subr.bf16.mxu0 0
    %1634 = vmatpush1.bf16.msra.mxu0 0
    %1635 = vmatprep.subr.bf16.mxu0 0
    %1636 = vmatpush1.bf16.msra.mxu0 0
    %1637 = vmatprep.subr.bf16.mxu0 0
    %1638 = vmatpush1.bf16.msra.mxu0 0
    %1639 = vmatprep.subr.bf16.mxu0 0
    %1640 = vmatpush1.bf16.msra.mxu0 0
    %1641 = vmatprep.subr.bf16.mxu0 0
    %1642 = vmatpush1.bf16.msra.mxu0 0
    %1643 = vmatprep.subr.bf16.mxu0 0
    %1644 = vmatpush1.bf16.msra.mxu0 0
    %1645 = vmatprep.subr.bf16.mxu0 0
    %1646 = vmatpush1.bf16.msra.mxu0 0
    %1647 = vmatprep.subr.bf16.mxu0 0
    %1648 = vmatpush1.bf16.msra.mxu0 0
    %1649 = vmatprep.mubr.bf16.mxu0 0
    %1650 = vmatmul.mubr.bf16.gmra.mrb[0].mxu0 %v1615
    %v1651 = vpop.f32.mrb[0].mxu0
    %v1652 = vadd.f32 %v792, %v1651
    %v1653 = vpop.f32.mrb[0].mxu0
    %v1654 = vpop.f32.mrb[0].mxu0
    %v1655 = vpop.f32.mrb[0].mxu0
    %1656 = vdwg.mxu0
    %v1657 = vpack.c.bf16 %v1609, %v1609
    %1659 = vrot.lane.b32.xlu0 %v1657, 32
    %v1660 = vpop.permute.xlu0 %1659
    %v1662 = vsel %vm88, %v1660, 0
    %1664 = vmatprep.subr.bf16.mxu0 0
    %1665 = vmatpush1.bf16.msra.mxu0 %v855
    %1666 = vmatprep.subr.bf16.mxu0 0
    %1667 = vmatpush1.bf16.msra.mxu0 %v856
    %1668 = vmatprep.subr.bf16.mxu0 0
    %1669 = vmatpush1.bf16.msra.mxu0 0
    %1670 = vmatprep.subr.bf16.mxu0 0
    %1671 = vmatpush1.bf16.msra.mxu0 0
    %1672 = vmatprep.subr.bf16.mxu0 0
    %1673 = vmatpush1.bf16.msra.mxu0 0
    %1674 = vmatprep.subr.bf16.mxu0 0
    %1675 = vmatpush1.bf16.msra.mxu0 0
    %1676 = vmatprep.subr.bf16.mxu0 0
    %1677 = vmatpush1.bf16.msra.mxu0 0
    %1678 = vmatprep.subr.bf16.mxu0 0
    %1679 = vmatpush1.bf16.msra.mxu0 0
    %1680 = vmatprep.subr.bf16.mxu0 0
    %1681 = vmatpush1.bf16.msra.mxu0 0
    %1682 = vmatprep.subr.bf16.mxu0 0
    %1683 = vmatpush1.bf16.msra.mxu0 0
    %1684 = vmatprep.subr.bf16.mxu0 0
    %1685 = vmatpush1.bf16.msra.mxu0 0
    %1686 = vmatprep.subr.bf16.mxu0 0
    %1687 = vmatpush1.bf16.msra.mxu0 0
    %1688 = vmatprep.subr.bf16.mxu0 0
    %1689 = vmatpush1.bf16.msra.mxu0 0
    %1690 = vmatprep.subr.bf16.mxu0 0
    %1691 = vmatpush1.bf16.msra.mxu0 0
    %1692 = vmatprep.subr.bf16.mxu0 0
    %1693 = vmatpush1.bf16.msra.mxu0 0
    %1694 = vmatprep.subr.bf16.mxu0 0
    %1695 = vmatpush1.bf16.msra.mxu0 0
    %1696 = vmatprep.mubr.bf16.mxu0 0
    %1697 = vmatmul.mubr.bf16.gmra.mrb[0].mxu0 %v1662
    %v1698 = vpop.f32.mrb[0].mxu0
    %v1699 = vadd.f32 0.0, %v1698
    %v1700 = vpop.f32.mrb[0].mxu0
    %v1701 = vpop.f32.mrb[0].mxu0
    %v1702 = vpop.f32.mrb[0].mxu0
    %1703 = vdwg.mxu0
    %v1704 = vadd.f32 %v1652, %v1699
    %v1705 = vtanh.pop %v1704
    %v1706 = vxor.u32 %v1704, 2147483648
    %v1707 = vmul.f32 %v1706, 1.442695
    %v1708 = vpow.pop %v1707
    %v1709 = vadd.f32 %v1708, 1.0
    %v1710 = vrcp.pop %v1709
    %v1711 = vmul.f32 1.0, %v1710
    %v1712 = vsel %vm48, %v1705, %v1711
    %v1713 = vmul.f32 %v1712, %v1603
    %1715 = vrot.lane.b32.xlu0 %v1712, 64
    %v1716 = vpop.permute.xlu0 %1715
    %v1718 = vmul.f32 %v1712, %v1716
    %1720 = vrot.lane.b32.xlu0 %v1718, 32
    %v1721 = vpop.permute.xlu0 %1720
    %v1723 = vadd.f32 %v1713, %v1721
    %v1724 = vtanh.pop %v1723
    %1726 = vrot.lane.b32.xlu0 %v1724, 64
    %v1727 = vpop.permute.xlu0 %1726
    %v1729 = vmul.f32 %v1712, %v1727
    %1731 = vrot.lane.b32.xlu0 %v1729, 32
    %v1732 = vpop.permute.xlu0 %1731
    %s1734 = scalar_lea.vmem [#allocation4], 8
    %1735 = vst.msk [vmem:[%s1734] sm:$0xff] %vm88, %v1732
    %1737 = vrot.lane.b32.xlu0 %v1723, 96
    %v1738 = vpop.permute.xlu0 %1737
    %s1740 = scalar_lea.vmem [#allocation6], 8
    %1741 = vst.msk [vmem:[%s1740] sm:$0xff] %vm88, %v1738
    %v1742 = vld [vmem:[%s7] sm:$0xf]
    %v1743 = vld [vmem:[%s7 + $0x4] sm:$0xf]
    %v1744 = vld [vmem:[%s7 + $0x8] sm:$0xf]
    %v1745 = vld [vmem:[%s7 + $0xc] sm:$0xf]
    %v1746 = vld [vmem:[%s8] sm:$0x1]
    %v1748 = vlaneseq
    %v1749 = vshrl.u32 %v1748, 7
    %v1750 = vsub.s32 0, %v1749
    %v1751 = vrot.slane %v1746, %v1750
    %v1757 = vunpack.c.l.b16 %v1742
    %v1758 = vunpack.c.l.b16 %v1743
    %v1759 = vunpack.c.l.b16 %v1744
    %v1760 = vunpack.c.l.b16 %v1745
    %v1761 = vpack.c.b16 %v1758, %v1757
    %v1762 = vpack.c.b16 %v1760, %v1759
    %1765 = vmatprep.subr.bf16.mxu0 0
    %1766 = vmatpush1.bf16.msra.mxu0 %v1761
    %1767 = vmatprep.subr.bf16.mxu0 0
    %1768 = vmatpush1.bf16.msra.mxu0 %v1762
    %1769 = vmatprep.subr.bf16.mxu0 0
    %1770 = vmatpush1.bf16.msra.mxu0 0
    %1771 = vmatprep.subr.bf16.mxu0 0
    %1772 = vmatpush1.bf16.msra.mxu0 0
    %1773 = vmatprep.subr.bf16.mxu0 0
    %1774 = vmatpush1.bf16.msra.mxu0 0
    %1775 = vmatprep.subr.bf16.mxu0 0
    %1776 = vmatpush1.bf16.msra.mxu0 0
    %1777 = vmatprep.subr.bf16.mxu0 0
    %1778 = vmatpush1.bf16.msra.mxu0 0
    %1779 = vmatprep.subr.bf16.mxu0 0
    %1780 = vmatpush1.bf16.msra.mxu0 0
    %1781 = vmatprep.subr.bf16.mxu0 0
    %1782 = vmatpush1.bf16.msra.mxu0 0
    %1783 = vmatprep.subr.bf16.mxu0 0
    %1784 = vmatpush1.bf16.msra.mxu0 0
    %1785 = vmatprep.subr.bf16.mxu0 0
    %1786 = vmatpush1.bf16.msra.mxu0 0
    %1787 = vmatprep.subr.bf16.mxu0 0
    %1788 = vmatpush1.bf16.msra.mxu0 0
    %1789 = vmatprep.subr.bf16.mxu0 0
    %1790 = vmatpush1.bf16.msra.mxu0 0
    %1791 = vmatprep.subr.bf16.mxu0 0
    %1792 = vmatpush1.bf16.msra.mxu0 0
    %1793 = vmatprep.subr.bf16.mxu0 0
    %1794 = vmatpush1.bf16.msra.mxu0 0
    %1795 = vmatprep.subr.bf16.mxu0 0
    %1796 = vmatpush1.bf16.msra.mxu0 0
    %1797 = vmatprep.mubr.bf16.mxu0 0
    %1798 = vmatmul.mubr.bf16.gmra.mrb[0].mxu0 %v977
    %v1799 = vpop.f32.mrb[0].mxu0
    %v1800 = vadd.f32 %v1751, %v1799
    %v1801 = vpop.f32.mrb[0].mxu0
    %v1802 = vpop.f32.mrb[0].mxu0
    %v1803 = vpop.f32.mrb[0].mxu0
    %1804 = vdwg.mxu0
    %1805 = vst [vmem:[#allocation2] sm:$0xff] %v1800
    %1806 = vmatprep.subr.bf16.mxu0 0
    %1807 = vmatpush1.bf16.msra.mxu0 %v1761
    %1808 = vmatprep.subr.bf16.mxu0 0
    %1809 = vmatpush1.bf16.msra.mxu0 %v1762
    %1810 = vmatprep.subr.bf16.mxu0 0
    %1811 = vmatpush1.bf16.msra.mxu0 0
    %1812 = vmatprep.subr.bf16.mxu0 0
    %1813 = vmatpush1.bf16.msra.mxu0 0
    %1814 = vmatprep.subr.bf16.mxu0 0
    %1815 = vmatpush1.bf16.msra.mxu0 0
    %1816 = vmatprep.subr.bf16.mxu0 0
    %1817 = vmatpush1.bf16.msra.mxu0 0
    %1818 = vmatprep.subr.bf16.mxu0 0
    %1819 = vmatpush1.bf16.msra.mxu0 0
    %1820 = vmatprep.subr.bf16.mxu0 0
    %1821 = vmatpush1.bf16.msra.mxu0 0
    %1822 = vmatprep.subr.bf16.mxu0 0
    %1823 = vmatpush1.bf16.msra.mxu0 0
    %1824 = vmatprep.subr.bf16.mxu0 0
    %1825 = vmatpush1.bf16.msra.mxu0 0
    %1826 = vmatprep.subr.bf16.mxu0 0
    %1827 = vmatpush1.bf16.msra.mxu0 0
    %1828 = vmatprep.subr.bf16.mxu0 0
    %1829 = vmatpush1.bf16.msra.mxu0 0
    %1830 = vmatprep.subr.bf16.mxu0 0
    %1831 = vmatpush1.bf16.msra.mxu0 0
    %1832 = vmatprep.subr.bf16.mxu0 0
    %1833 = vmatpush1.bf16.msra.mxu0 0
    %1834 = vmatprep.subr.bf16.mxu0 0
    %1835 = vmatpush1.bf16.msra.mxu0 0
    %1836 = vmatprep.subr.bf16.mxu0 0
    %1837 = vmatpush1.bf16.msra.mxu0 0
    %1838 = vmatprep.mubr.bf16.mxu0 0
    %1839 = vmatmul.mubr.bf16.gmra.mrb[0].mxu0 %v1090
    %v1840 = vpop.f32.mrb[0].mxu0
    %v1841 = vadd.f32 %v1751, %v1840
    %v1842 = vpop.f32.mrb[0].mxu0
    %v1843 = vpop.f32.mrb[0].mxu0
    %v1844 = vpop.f32.mrb[0].mxu0
    %1845 = vdwg.mxu0
    %1846 = vst [vmem:[#allocation2 + $0x8] sm:$0xff] %v1841
    %1847 = vmatprep.subr.bf16.mxu0 0
    %1848 = vmatpush1.bf16.msra.mxu0 %v1761
    %1849 = vmatprep.subr.bf16.mxu0 0
    %1850 = vmatpush1.bf16.msra.mxu0 %v1762
    %1851 = vmatprep.subr.bf16.mxu0 0
    %1852 = vmatpush1.bf16.msra.mxu0 0
    %1853 = vmatprep.subr.bf16.mxu0 0
    %1854 = vmatpush1.bf16.msra.mxu0 0
    %1855 = vmatprep.subr.bf16.mxu0 0
    %1856 = vmatpush1.bf16.msra.mxu0 0
    %1857 = vmatprep.subr.bf16.mxu0 0
    %1858 = vmatpush1.bf16.msra.mxu0 0
    %1859 = vmatprep.subr.bf16.mxu0 0
    %1860 = vmatpush1.bf16.msra.mxu0 0
    %1861 = vmatprep.subr.bf16.mxu0 0
    %1862 = vmatpush1.bf16.msra.mxu0 0
    %1863 = vmatprep.subr.bf16.mxu0 0
    %1864 = vmatpush1.bf16.msra.mxu0 0
    %1865 = vmatprep.subr.bf16.mxu0 0
    %1866 = vmatpush1.bf16.msra.mxu0 0
    %1867 = vmatprep.subr.bf16.mxu0 0
    %1868 = vmatpush1.bf16.msra.mxu0 0
    %1869 = vmatprep.subr.bf16.mxu0 0
    %1870 = vmatpush1.bf16.msra.mxu0 0
    %1871 = vmatprep.subr.bf16.mxu0 0
    %1872 = vmatpush1.bf16.msra.mxu0 0
    %1873 = vmatprep.subr.bf16.mxu0 0
    %1874 = vmatpush1.bf16.msra.mxu0 0
    %1875 = vmatprep.subr.bf16.mxu0 0
    %1876 = vmatpush1.bf16.msra.mxu0 0
    %1877 = vmatprep.subr.bf16.mxu0 0
    %1878 = vmatpush1.bf16.msra.mxu0 0
    %1879 = vmatprep.mubr.bf16.mxu0 0
    %1880 = vmatmul.mubr.bf16.gmra.mrb[0].mxu0 %v1203
    %v1881 = vpop.f32.mrb[0].mxu0
    %v1882 = vadd.f32 %v1751, %v1881
    %v1883 = vpop.f32.mrb[0].mxu0
    %v1884 = vpop.f32.mrb[0].mxu0
    %v1885 = vpop.f32.mrb[0].mxu0
    %1886 = vdwg.mxu0
    %1887 = vst [vmem:[#allocation2 + $0x10] sm:$0xff] %v1882
    %1888 = vmatprep.subr.bf16.mxu0 0
    %1889 = vmatpush1.bf16.msra.mxu0 %v1761
    %1890 = vmatprep.subr.bf16.mxu0 0
    %1891 = vmatpush1.bf16.msra.mxu0 %v1762
    %1892 = vmatprep.subr.bf16.mxu0 0
    %1893 = vmatpush1.bf16.msra.mxu0 0
    %1894 = vmatprep.subr.bf16.mxu0 0
    %1895 = vmatpush1.bf16.msra.mxu0 0
    %1896 = vmatprep.subr.bf16.mxu0 0
    %1897 = vmatpush1.bf16.msra.mxu0 0
    %1898 = vmatprep.subr.bf16.mxu0 0
    %1899 = vmatpush1.bf16.msra.mxu0 0
    %1900 = vmatprep.subr.bf16.mxu0 0
    %1901 = vmatpush1.bf16.msra.mxu0 0
    %1902 = vmatprep.subr.bf16.mxu0 0
    %1903 = vmatpush1.bf16.msra.mxu0 0
    %1904 = vmatprep.subr.bf16.mxu0 0
    %1905 = vmatpush1.bf16.msra.mxu0 0
    %1906 = vmatprep.subr.bf16.mxu0 0
    %1907 = vmatpush1.bf16.msra.mxu0 0
    %1908 = vmatprep.subr.bf16.mxu0 0
    %1909 = vmatpush1.bf16.msra.mxu0 0
    %1910 = vmatprep.subr.bf16.mxu0 0
    %1911 = vmatpush1.bf16.msra.mxu0 0
    %1912 = vmatprep.subr.bf16.mxu0 0
    %1913 = vmatpush1.bf16.msra.mxu0 0
    %1914 = vmatprep.subr.bf16.mxu0 0
    %1915 = vmatpush1.bf16.msra.mxu0 0
    %1916 = vmatprep.subr.bf16.mxu0 0
    %1917 = vmatpush1.bf16.msra.mxu0 0
    %1918 = vmatprep.subr.bf16.mxu0 0
    %1919 = vmatpush1.bf16.msra.mxu0 0
    %1920 = vmatprep.mubr.bf16.mxu0 0
    %1921 = vmatmul.mubr.bf16.gmra.mrb[0].mxu0 %v1316
    %v1922 = vpop.f32.mrb[0].mxu0
    %v1923 = vadd.f32 %v1751, %v1922
    %v1924 = vpop.f32.mrb[0].mxu0
    %v1925 = vpop.f32.mrb[0].mxu0
    %v1926 = vpop.f32.mrb[0].mxu0
    %1927 = vdwg.mxu0
    %1928 = vst [vmem:[#allocation2 + $0x18] sm:$0xff] %v1923
    %1929 = vmatprep.subr.bf16.mxu0 0
    %1930 = vmatpush1.bf16.msra.mxu0 %v1761
    %1931 = vmatprep.subr.bf16.mxu0 0
    %1932 = vmatpush1.bf16.msra.mxu0 %v1762
    %1933 = vmatprep.subr.bf16.mxu0 0
    %1934 = vmatpush1.bf16.msra.mxu0 0
    %1935 = vmatprep.subr.bf16.mxu0 0
    %1936 = vmatpush1.bf16.msra.mxu0 0
    %1937 = vmatprep.subr.bf16.mxu0 0
    %1938 = vmatpush1.bf16.msra.mxu0 0
    %1939 = vmatprep.subr.bf16.mxu0 0
    %1940 = vmatpush1.bf16.msra.mxu0 0
    %1941 = vmatprep.subr.bf16.mxu0 0
    %1942 = vmatpush1.bf16.msra.mxu0 0
    %1943 = vmatprep.subr.bf16.mxu0 0
    %1944 = vmatpush1.bf16.msra.mxu0 0
    %1945 = vmatprep.subr.bf16.mxu0 0
    %1946 = vmatpush1.bf16.msra.mxu0 0
    %1947 = vmatprep.subr.bf16.mxu0 0
    %1948 = vmatpush1.bf16.msra.mxu0 0
    %1949 = vmatprep.subr.bf16.mxu0 0
    %1950 = vmatpush1.bf16.msra.mxu0 0
    %1951 = vmatprep.subr.bf16.mxu0 0
    %1952 = vmatpush1.bf16.msra.mxu0 0
    %1953 = vmatprep.subr.bf16.mxu0 0
    %1954 = vmatpush1.bf16.msra.mxu0 0
    %1955 = vmatprep.subr.bf16.mxu0 0
    %1956 = vmatpush1.bf16.msra.mxu0 0
    %1957 = vmatprep.subr.bf16.mxu0 0
    %1958 = vmatpush1.bf16.msra.mxu0 0
    %1959 = vmatprep.subr.bf16.mxu0 0
    %1960 = vmatpush1.bf16.msra.mxu0 0
    %1961 = vmatprep.mubr.bf16.mxu0 0
    %1962 = vmatmul.mubr.bf16.gmra.mrb[0].mxu0 %v1429
    %v1963 = vpop.f32.mrb[0].mxu0
    %v1964 = vadd.f32 %v1751, %v1963
    %v1965 = vpop.f32.mrb[0].mxu0
    %v1966 = vpop.f32.mrb[0].mxu0
    %v1967 = vpop.f32.mrb[0].mxu0
    %1968 = vdwg.mxu0
    %1969 = vst [vmem:[#allocation2 + $0x20] sm:$0xff] %v1964
    %1970 = vmatprep.subr.bf16.mxu0 0
    %1971 = vmatpush1.bf16.msra.mxu0 %v1761
    %1972 = vmatprep.subr.bf16.mxu0 0
    %1973 = vmatpush1.bf16.msra.mxu0 %v1762
    %1974 = vmatprep.subr.bf16.mxu0 0
    %1975 = vmatpush1.bf16.msra.mxu0 0
    %1976 = vmatprep.subr.bf16.mxu0 0
    %1977 = vmatpush1.bf16.msra.mxu0 0
    %1978 = vmatprep.subr.bf16.mxu0 0
    %1979 = vmatpush1.bf16.msra.mxu0 0
    %1980 = vmatprep.subr.bf16.mxu0 0
    %1981 = vmatpush1.bf16.msra.mxu0 0
    %1982 = vmatprep.subr.bf16.mxu0 0
    %1983 = vmatpush1.bf16.msra.mxu0 0
    %1984 = vmatprep.subr.bf16.mxu0 0
    %1985 = vmatpush1.bf16.msra.mxu0 0
    %1986 = vmatprep.subr.bf16.mxu0 0
    %1987 = vmatpush1.bf16.msra.mxu0 0
    %1988 = vmatprep.subr.bf16.mxu0 0
    %1989 = vmatpush1.bf16.msra.mxu0 0
    %1990 = vmatprep.subr.bf16.mxu0 0
    %1991 = vmatpush1.bf16.msra.mxu0 0
    %1992 = vmatprep.subr.bf16.mxu0 0
    %1993 = vmatpush1.bf16.msra.mxu0 0
    %1994 = vmatprep.subr.bf16.mxu0 0
    %1995 = vmatpush1.bf16.msra.mxu0 0
    %1996 = vmatprep.subr.bf16.mxu0 0
    %1997 = vmatpush1.bf16.msra.mxu0 0
    %1998 = vmatprep.subr.bf16.mxu0 0
    %1999 = vmatpush1.bf16.msra.mxu0 0
    %2000 = vmatprep.subr.bf16.mxu0 0
    %2001 = vmatpush1.bf16.msra.mxu0 0
    %2002 = vmatprep.mubr.bf16.mxu0 0
    %2003 = vmatmul.mubr.bf16.gmra.mrb[0].mxu0 %v1542
    %v2004 = vpop.f32.mrb[0].mxu0
    %v2005 = vadd.f32 %v1751, %v2004
    %v2006 = vpop.f32.mrb[0].mxu0
    %v2007 = vpop.f32.mrb[0].mxu0
    %v2008 = vpop.f32.mrb[0].mxu0
    %2009 = vdwg.mxu0
    %2010 = vst [vmem:[#allocation2 + $0x28] sm:$0xff] %v2005
    %2011 = vmatprep.subr.bf16.mxu0 0
    %2012 = vmatpush1.bf16.msra.mxu0 %v1761
    %2013 = vmatprep.subr.bf16.mxu0 0
    %2014 = vmatpush1.bf16.msra.mxu0 %v1762
    %2015 = vmatprep.subr.bf16.mxu0 0
    %2016 = vmatpush1.bf16.msra.mxu0 0
    %2017 = vmatprep.subr.bf16.mxu0 0
    %2018 = vmatpush1.bf16.msra.mxu0 0
    %2019 = vmatprep.subr.bf16.mxu0 0
    %2020 = vmatpush1.bf16.msra.mxu0 0
    %2021 = vmatprep.subr.bf16.mxu0 0
    %2022 = vmatpush1.bf16.msra.mxu0 0
    %2023 = vmatprep.subr.bf16.mxu0 0
    %2024 = vmatpush1.bf16.msra.mxu0 0
    %2025 = vmatprep.subr.bf16.mxu0 0
    %2026 = vmatpush1.bf16.msra.mxu0 0
    %2027 = vmatprep.subr.bf16.mxu0 0
    %2028 = vmatpush1.bf16.msra.mxu0 0
    %2029 = vmatprep.subr.bf16.mxu0 0
    %2030 = vmatpush1.bf16.msra.mxu0 0
    %2031 = vmatprep.subr.bf16.mxu0 0
    %2032 = vmatpush1.bf16.msra.mxu0 0
    %2033 = vmatprep.subr.bf16.mxu0 0
    %2034 = vmatpush1.bf16.msra.mxu0 0
    %2035 = vmatprep.subr.bf16.mxu0 0
    %2036 = vmatpush1.bf16.msra.mxu0 0
    %2037 = vmatprep.subr.bf16.mxu0 0
    %2038 = vmatpush1.bf16.msra.mxu0 0
    %2039 = vmatprep.subr.bf16.mxu0 0
    %2040 = vmatpush1.bf16.msra.mxu0 0
    %2041 = vmatprep.subr.bf16.mxu0 0
    %2042 = vmatpush1.bf16.msra.mxu0 0
    %2043 = vmatprep.mubr.bf16.mxu0 0
    %2044 = vmatmul.mubr.bf16.gmra.mrb[0].mxu0 %v1662
    %v2045 = vpop.f32.mrb[0].mxu0
    %v2046 = vadd.f32 %v1751, %v2045
    %v2047 = vpop.f32.mrb[0].mxu0
    %v2048 = vpop.f32.mrb[0].mxu0
    %v2049 = vpop.f32.mrb[0].mxu0
    %2050 = vdwg.mxu0
    %2051 = vst [vmem:[#allocation2 + $0x30] sm:$0xff] %v2046
    %v2052 = vpack.c.bf16 %v1729, %v1729
    %2054 = vrot.lane.b32.xlu0 %v2052, 32
    %v2055 = vpop.permute.xlu0 %2054
    %v2057 = vsel %vm88, %v2055, 0
    %2059 = vmatprep.subr.bf16.mxu0 0
    %2060 = vmatpush1.bf16.msra.mxu0 %v1761
    %2061 = vmatprep.subr.bf16.mxu0 0
    %2062 = vmatpush1.bf16.msra.mxu0 %v1762
    %2063 = vmatprep.subr.bf16.mxu0 0
    %2064 = vmatpush1.bf16.msra.mxu0 0
    %2065 = vmatprep.subr.bf16.mxu0 0
    %2066 = vmatpush1.bf16.msra.mxu0 0
    %2067 = vmatprep.subr.bf16.mxu0 0
    %2068 = vmatpush1.bf16.msra.mxu0 0
    %2069 = vmatprep.subr.bf16.mxu0 0
    %2070 = vmatpush1.bf16.msra.mxu0 0
    %2071 = vmatprep.subr.bf16.mxu0 0
    %2072 = vmatpush1.bf16.msra.mxu0 0
    %2073 = vmatprep.subr.bf16.mxu0 0
    %2074 = vmatpush1.bf16.msra.mxu0 0
    %2075 = vmatprep.subr.bf16.mxu0 0
    %2076 = vmatpush1.bf16.msra.mxu0 0
    %2077 = vmatprep.subr.bf16.mxu0 0
    %2078 = vmatpush1.bf16.msra.mxu0 0
    %2079 = vmatprep.subr.bf16.mxu0 0
    %2080 = vmatpush1.bf16.msra.mxu0 0
    %2081 = vmatprep.subr.bf16.mxu0 0
    %2082 = vmatpush1.bf16.msra.mxu0 0
    %2083 = vmatprep.subr.bf16.mxu0 0
    %2084 = vmatpush1.bf16.msra.mxu0 0
    %2085 = vmatprep.subr.bf16.mxu0 0
    %2086 = vmatpush1.bf16.msra.mxu0 0
    %2087 = vmatprep.subr.bf16.mxu0 0
    %2088 = vmatpush1.bf16.msra.mxu0 0
    %2089 = vmatprep.subr.bf16.mxu0 0
    %2090 = vmatpush1.bf16.msra.mxu0 0
    %2091 = vmatprep.mubr.bf16.mxu0 0
    %2092 = vmatmul.mubr.bf16.gmra.mrb[0].mxu0 %v2057
    %v2093 = vpop.f32.mrb[0].mxu0
    %v2094 = vadd.f32 %v1751, %v2093
    %v2095 = vpop.f32.mrb[0].mxu0
    %v2096 = vpop.f32.mrb[0].mxu0
    %v2097 = vpop.f32.mrb[0].mxu0
    %2098 = vdwg.mxu0
    %2099 = vst [vmem:[#allocation2 + $0x38] sm:$0xff] %v2094
    // Predicated region
    $region46: #{tpu_custom_call.1} parent=1 // pred_check
      _
    $region47: #{tpu_custom_call.1} parent=1 // pred_check_branch
      %2101 = sbr.rel (0) target = $region49
    $region48: #{tpu_custom_call.1} parent=1 // pred_region
      %s2103 = ssub.s32 1024, 1024
      %2104 = vsyncadd [#allocation3], %s2103
      %s2105 = sshll.u32 [#allocation2], 4
      %s2106 = int_to_ptr.vmem [resolvable:$true] %s2105
      %2111 = dma.vmem_to_hbm [thread:$0]  %s2106, 1024, %s11, [#allocation3], 128, 128, 8
    $region49: #{tpu_custom_call.1} parent=1 // pred_fallthru
      _
    // Predicated region
    $region50: #{tpu_custom_call.1} parent=1 // pred_check
      _
    $region51: #{tpu_custom_call.1} parent=1 // pred_check_branch
      %2113 = sbr.rel (0) target = $region53
    $region52: #{tpu_custom_call.1} parent=1 // pred_region
      %s2115 = ssub.s32 256, 256
      %2116 = vsyncadd [#allocation5], %s2115
      %s2117 = sshll.u32 [#allocation4], 4
      %s2118 = int_to_ptr.vmem [resolvable:$true] %s2117
      %2123 = dma.vmem_to_hbm [thread:$0]  %s2118, 256, %s12, [#allocation5], 128, 128, 8
    $region53: #{tpu_custom_call.1} parent=1 // pred_fallthru
      _
    // Predicated region
    $region54: #{tpu_custom_call.1} parent=1 // pred_check
      _
    $region55: #{tpu_custom_call.1} parent=1 // pred_check_branch
      %2125 = sbr.rel (0) target = $region57
    $region56: #{tpu_custom_call.1} parent=1 // pred_region
      %s2127 = ssub.s32 256, 256
      %2128 = vsyncadd [#allocation5], %s2127
      %s2129 = sshll.u32 [#allocation6], 4
      %s2130 = int_to_ptr.vmem [resolvable:$true] %s2129
      %2135 = dma.vmem_to_hbm [thread:$0]  %s2130, 256, %s13, [#allocation5], 128, 128, 8
    $region57: #{tpu_custom_call.1} parent=1 // pred_fallthru
      _
    // Predicated region
    $region58: #{tpu_custom_call.1} parent=1 // pred_check
      _
    $region59: #{tpu_custom_call.1} parent=1 // pred_check_branch
      %2137 = sbr.rel (0) target = $region61
    $region60: #{tpu_custom_call.1} parent=1 // pred_region
      %2138 = dma.done [#allocation3], 1024
    $region61: #{tpu_custom_call.1} parent=1 // pred_fallthru
      _
    // Predicated region
    $region62: #{tpu_custom_call.1} parent=1 // pred_check
      _
    $region63: #{tpu_custom_call.1} parent=1 // pred_check_branch
      %2140 = sbr.rel (0) target = $region65
    $region64: #{tpu_custom_call.1} parent=1 // pred_region
      %2141 = dma.done [#allocation5], 256
    $region65: #{tpu_custom_call.1} parent=1 // pred_fallthru
      _
    // Predicated region
    $region66: #{tpu_custom_call.1} parent=1 // pred_check
      _
    $region67: #{tpu_custom_call.1} parent=1 // pred_check_branch
      %2143 = sbr.rel (0) target = $region69
    $region68: #{tpu_custom_call.1} parent=1 // pred_region
      %2144 = dma.done [#allocation5], 256
    $region69: #{tpu_custom_call.1} parent=1 // pred_fallthru
      _
    %2145 = vsyncpa [#allocation3], 1
    %2146 = vsyncpa [#allocation5], 1

</llo_original>
